<compile_context>
chip_gen: v6e
topology: v6e:2x2x1
jax: 0.10.0
libtpu: 0.0.40
codegen_flags: <defaults>
</compile_context>

<pallas_src>
import functools
import numpy as np
import jax
import jax.numpy as jnp
from jax.experimental import pallas as pl
from jax.experimental.pallas import tpu as pltpu


_LANES = 128          # points per lane-row
_MAX_ROW_TILE = 512   # 512 rows * 128 lanes = 65536 points per grid step


def _scalar_field_kernel(x_ref, raff_ref, rtrans_ref, rps_ref,
                         aaff_ref, atrans_ref, out_ref, *, D, M, A):
    """One grid step processes a (TS, 128) slab of points.

    x_ref      : (D, TS, 128) VMEM  -- coordinate-major, points dense on
                                       sublanes x lanes
    raff_ref   : (M*D*D,) SMEM      -- rbf affine, row-major [m, d, k],
                                       pre-scaled by eps[m]
    rtrans_ref : (M*D,)   SMEM      -- rbf translation [m, d], pre-scaled by eps[m]
    rps_ref    : (M,)     SMEM      -- post scale, pre-scaled by 1/M
    aaff_ref   : (A*D*D,) SMEM      -- ambient affine [a, d, k], pre-scaled by 1/A
    atrans_ref : (A*D,)   SMEM      -- ambient translation [a, d], pre-scaled by 1/A
    out_ref    : (TS, 128) VMEM     -- lane-dense output slab
    """
    xs = [x_ref[d] for d in range(D)]            # D dense (TS, 128) slabs

    acc = jnp.zeros(xs[0].shape, jnp.float32)

    # ---------------- RBF components (EXPONENTIAL) ----------------
    # ps'_m * exp(-|| eps_m * (E_m @ x + t_m) ||)   with ps'_m = ps_m / M
    for m in range(M):
        r2 = None
        for d in range(D):
            y = xs[0] * raff_ref[m * D * D + d * D]
            for k in range(1, D):
                y = y + xs[k] * raff_ref[m * D * D + d * D + k]
            y = y + rtrans_ref[m * D + d]
            r2 = y * y if r2 is None else r2 + y * y
        acc = acc + jnp.exp(-jnp.sqrt(r2)) * rps_ref[m]

    # ---------------- Ambient components (IDENTITY) ----------------
    # || (E_a / A) @ x + t_a / A ||  (mean over A folded into the params)
    for a in range(A):
        r2 = None
        for d in range(D):
            y = xs[0] * aaff_ref[a * D * D + d * D]
            for k in range(1, D):
                y = y + xs[k] * aaff_ref[a * D * D + d * D + k]
            y = y + atrans_ref[a * D + d]
            r2 = y * y if r2 is None else r2 + y * y
        acc = acc + jnp.sqrt(r2)

    out_ref[...] = acc


def scalar_field_by_rbf(x, rbf_affine, rbf_translation, rbf_eps_sqrt,
                        rbf_post_scale, amb_affine, amb_translation):
    """x: (N, D); rbf_affine: (M, D, D); rbf_translation: (M, D);
    rbf_eps_sqrt, rbf_post_scale: (M,); amb_affine: (A, D, D);
    amb_translation: (A, D).  Returns (N,) float32."""
    N, D = x.shape
    M = rbf_affine.shape[0]
    A = amb_affine.shape[0]
    L = _LANES

    # ---- point tiling: rows of 128 points, TS rows per grid step ----
    n_rows = pl.cdiv(N, L)
    if n_rows <= 8:
        TS = n_rows                   # single tile; block == full extent
    else:
        # At least 2 tiles (megacore sharding on the "parallel" grid axis),
        # tiles as large as possible (<= _MAX_ROW_TILE) with minimal padding.
        num_tiles = max(2, pl.cdiv(n_rows, _MAX_ROW_TILE))
        TS = min(_MAX_ROW_TILE, ((pl.cdiv(n_rows, num_tiles) + 7) // 8) * 8)
    rows_pad = pl.cdiv(n_rows, TS) * TS
    n_pad = rows_pad * L
    grid = rows_pad // TS

    # coordinate-major, zero-padded, points dense over (sublane, lane)
    xt = jnp.pad(x.astype(jnp.float32).T, ((0, 0), (0, n_pad - N)))
    x_packed = xt.reshape(D, rows_pad, L)

    # parameters -> flat f32 SMEM tables (scalar broadcasts in the kernel).
    # Exact folds (all scale factors are >= 0, so ||s*y|| == s*||y||):
    #   eps_m   -> into rbf affine + translation rows
    #   1/M     -> into rbf post_scale
    #   1/A     -> into ambient affine + translation rows
    eps = rbf_eps_sqrt.astype(jnp.float32) ** 2
    raff = (rbf_affine.astype(jnp.float32)
            * eps[:, None, None]).reshape(M * D * D)
    rtrans = (rbf_translation.astype(jnp.float32)
              * eps[:, None]).reshape(M * D)
    rps = (rbf_post_scale.astype(jnp.float32) * (1.0 / M)).reshape(M)
    aaff = (amb_affine.astype(jnp.float32) * (1.0 / A)).reshape(A * D * D)
    atrans = (amb_translation.astype(jnp.float32) * (1.0 / A)).reshape(A * D)

    kernel = functools.partial(_scalar_field_kernel, D=D, M=M, A=A)
    smem_spec = pl.BlockSpec(memory_space=pltpu.MemorySpace.SMEM)

    out = pl.pallas_call(
        kernel,
        out_shape=jax.ShapeDtypeStruct((rows_pad, L), jnp.float32),
        grid_spec=pltpu.PrefetchScalarGridSpec(
            num_scalar_prefetch=0,
            grid=(grid,),
            in_specs=[
                pl.BlockSpec((D, TS, L), lambda i: (0, i, 0)),
                smem_spec, smem_spec, smem_spec,
                smem_spec, smem_spec,
            ],
            out_specs=pl.BlockSpec((TS, L), lambda i: (i, 0)),
        ),
        compiler_params=pltpu.CompilerParams(
            dimension_semantics=("parallel",)),
    )(x_packed, raff, rtrans, rps, aaff, atrans)

    return out.reshape(n_pad)[:N]


def reference(x, rbf_affine, rbf_translation, rbf_eps_sqrt, rbf_post_scale,
              amb_affine, amb_translation):
    # Faithful (unfolded) module math, used to validate the algebraic folds.
    xt = jnp.einsum('mdk,nk->nmd', rbf_affine, x) + rbf_translation[None]
    r = jnp.linalg.norm(xt, axis=-1)
    rbf_vals = jnp.exp(-(rbf_eps_sqrt ** 2)[None, :] * r) * rbf_post_scale[None, :]
    out = jnp.mean(rbf_vals, axis=-1)
    xta = jnp.einsum('adk,nk->nad', amb_affine, x) + amb_translation[None]
    ra = jnp.linalg.norm(xta, axis=-1)
    return out + jnp.mean(ra, axis=-1)


if __name__ == "__main__":
    # Module config (small): point_dim=3, 8 rbf components, 4 ambient components.
    # N deliberately NOT a multiple of 128 to exercise the padded-tile path.
    D, M, A, N = 3, 8, 4, 300

    key = jax.random.PRNGKey(0)
    ks = jax.random.split(key, 8)

    # Deterministic parameter init mirroring __init__ (shapes/distributions).
    # coordinate_expected_range defaults to (-1, 1) per dim.
    rbf_translation = -jax.random.uniform(ks[0], (M, D), minval=-1.0, maxval=1.0)
    rbf_affine = jax.random.normal(ks[1], (M, D, D))
    rbf_post_scale = jax.random.normal(ks[2], (M,))
    eps_lo, eps_hi = np.log10(np.array((0.001, 1000.0)) + 0.001)
    rbf_eps_sqrt = jnp.sqrt(jnp.exp(
        jax.random.uniform(ks[3], (M,), minval=eps_lo, maxval=eps_hi)))

    amb_translation = -jax.random.uniform(ks[4], (A, D), minval=-1.0, maxval=1.0)
    amb_affine = jax.random.normal(ks[5], (A, D, D))
    # ambient post_scale / eps exist in the module but are not used by
    # evaluate_ambient (IDENTITY), so they do not enter the forward pass.

    x = jax.random.normal(ks[6], (N, D), dtype=jnp.float32)

    args = (x, rbf_affine.astype(jnp.float32), rbf_translation.astype(jnp.float32),
            rbf_eps_sqrt.astype(jnp.float32), rbf_post_scale.astype(jnp.float32),
            amb_affine.astype(jnp.float32), amb_translation.astype(jnp.float32))

    out = scalar_field_by_rbf(*args)
    out = jax.block_until_ready(out)

    ref = reference(*args)
    np.testing.assert_allclose(np.asarray(out), np.asarray(ref),
                               rtol=1e-5, atol=1e-5)
    print("KERNEL_OK")
</pallas_src>

<mosaic_0001>
module attributes {stable_mosaic.version = 11 : i64} {
  func.func @_scalar_field_kernel(%arg0: i32, %arg1: memref<3x3x128xf32, #tpu.memory_space<vmem>>, %arg2: memref<72xf32, #tpu.memory_space<smem>>, %arg3: memref<24xf32, #tpu.memory_space<smem>>, %arg4: memref<8xf32, #tpu.memory_space<smem>>, %arg5: memref<36xf32, #tpu.memory_space<smem>>, %arg6: memref<12xf32, #tpu.memory_space<smem>>, %arg7: memref<3x128xf32, #tpu.memory_space<vmem>>) attributes {dimension_semantics = [#tpu.dimension_semantics<parallel>], iteration_bounds = array<i64: 1>, scalar_prefetch = 0 : i64, scratch_operands = 0 : i64, tpu.core_type = #tpu.core_type<tc>, window_params = [{transform_indices = @transform_0, window_bounds = array<i64: 3, 3, 128>}, {transform_indices = @transform_1, window_bounds = array<i64: 72>}, {transform_indices = @transform_2, window_bounds = array<i64: 24>}, {transform_indices = @transform_3, window_bounds = array<i64: 8>}, {transform_indices = @transform_4, window_bounds = array<i64: 36>}, {transform_indices = @transform_5, window_bounds = array<i64: 12>}, {transform_indices = @transform_6, window_bounds = array<i64: 3, 128>}]} {
    %c0 = arith.constant 0 : index
    %c0_0 = arith.constant 0 : index
    %c0_1 = arith.constant 0 : index
    %0 = vector.load %arg1[%c0, %c0_0, %c0_1] : memref<3x3x128xf32, #tpu.memory_space<vmem>>, vector<1x3x128xf32>
    %1 = vector.shape_cast %0 : vector<1x3x128xf32> to vector<3x128xf32>
    %c1 = arith.constant 1 : index
    %c0_2 = arith.constant 0 : index
    %c0_3 = arith.constant 0 : index
    %2 = vector.load %arg1[%c1, %c0_2, %c0_3] : memref<3x3x128xf32, #tpu.memory_space<vmem>>, vector<1x3x128xf32>
    %3 = vector.shape_cast %2 : vector<1x3x128xf32> to vector<3x128xf32>
    %c2 = arith.constant 2 : index
    %c0_4 = arith.constant 0 : index
    %c0_5 = arith.constant 0 : index
    %4 = vector.load %arg1[%c2, %c0_4, %c0_5] : memref<3x3x128xf32, #tpu.memory_space<vmem>>, vector<1x3x128xf32>
    %5 = vector.shape_cast %4 : vector<1x3x128xf32> to vector<3x128xf32>
    %cst = arith.constant 0.000000e+00 : f32
    %6 = vector.broadcast %cst : f32 to vector<3x128xf32>
    %c0_6 = arith.constant 0 : index
    %7 = memref.load %arg2[%c0_6] : memref<72xf32, #tpu.memory_space<smem>>
    %8 = vector.broadcast %7 : f32 to vector<3x128xf32>
    %9 = arith.mulf %1, %8 : vector<3x128xf32>
    %c1_7 = arith.constant 1 : index
    %10 = memref.load %arg2[%c1_7] : memref<72xf32, #tpu.memory_space<smem>>
    %11 = vector.broadcast %10 : f32 to vector<3x128xf32>
    %12 = arith.mulf %3, %11 : vector<3x128xf32>
    %13 = arith.addf %9, %12 : vector<3x128xf32>
    %c2_8 = arith.constant 2 : index
    %14 = memref.load %arg2[%c2_8] : memref<72xf32, #tpu.memory_space<smem>>
    %15 = vector.broadcast %14 : f32 to vector<3x128xf32>
    %16 = arith.mulf %5, %15 : vector<3x128xf32>
    %17 = arith.addf %13, %16 : vector<3x128xf32>
    %c0_9 = arith.constant 0 : index
    %18 = memref.load %arg3[%c0_9] : memref<24xf32, #tpu.memory_space<smem>>
    %19 = vector.broadcast %18 : f32 to vector<3x128xf32>
    %20 = arith.addf %17, %19 : vector<3x128xf32>
    %21 = arith.mulf %20, %20 : vector<3x128xf32>
    %c3 = arith.constant 3 : index
    %22 = memref.load %arg2[%c3] : memref<72xf32, #tpu.memory_space<smem>>
    %23 = vector.broadcast %22 : f32 to vector<3x128xf32>
    %24 = arith.mulf %1, %23 : vector<3x128xf32>
    %c4 = arith.constant 4 : index
    %25 = memref.load %arg2[%c4] : memref<72xf32, #tpu.memory_space<smem>>
    %26 = vector.broadcast %25 : f32 to vector<3x128xf32>
    %27 = arith.mulf %3, %26 : vector<3x128xf32>
    %28 = arith.addf %24, %27 : vector<3x128xf32>
    %c5 = arith.constant 5 : index
    %29 = memref.load %arg2[%c5] : memref<72xf32, #tpu.memory_space<smem>>
    %30 = vector.broadcast %29 : f32 to vector<3x128xf32>
    %31 = arith.mulf %5, %30 : vector<3x128xf32>
    %32 = arith.addf %28, %31 : vector<3x128xf32>
    %c1_10 = arith.constant 1 : index
    %33 = memref.load %arg3[%c1_10] : memref<24xf32, #tpu.memory_space<smem>>
    %34 = vector.broadcast %33 : f32 to vector<3x128xf32>
    %35 = arith.addf %32, %34 : vector<3x128xf32>
    %36 = arith.mulf %35, %35 : vector<3x128xf32>
    %37 = arith.addf %21, %36 : vector<3x128xf32>
    %c6 = arith.constant 6 : index
    %38 = memref.load %arg2[%c6] : memref<72xf32, #tpu.memory_space<smem>>
    %39 = vector.broadcast %38 : f32 to vector<3x128xf32>
    %40 = arith.mulf %1, %39 : vector<3x128xf32>
    %c7 = arith.constant 7 : index
    %41 = memref.load %arg2[%c7] : memref<72xf32, #tpu.memory_space<smem>>
    %42 = vector.broadcast %41 : f32 to vector<3x128xf32>
    %43 = arith.mulf %3, %42 : vector<3x128xf32>
    %44 = arith.addf %40, %43 : vector<3x128xf32>
    %c8 = arith.constant 8 : index
    %45 = memref.load %arg2[%c8] : memref<72xf32, #tpu.memory_space<smem>>
    %46 = vector.broadcast %45 : f32 to vector<3x128xf32>
    %47 = arith.mulf %5, %46 : vector<3x128xf32>
    %48 = arith.addf %44, %47 : vector<3x128xf32>
    %c2_11 = arith.constant 2 : index
    %49 = memref.load %arg3[%c2_11] : memref<24xf32, #tpu.memory_space<smem>>
    %50 = vector.broadcast %49 : f32 to vector<3x128xf32>
    %51 = arith.addf %48, %50 : vector<3x128xf32>
    %52 = arith.mulf %51, %51 : vector<3x128xf32>
    %53 = arith.addf %37, %52 : vector<3x128xf32>
    %54 = math.sqrt %53 : vector<3x128xf32>
    %cst_12 = arith.constant 0.000000e+00 : f32
    %55 = vector.broadcast %cst_12 : f32 to vector<3x128xf32>
    %56 = arith.subf %55, %54 : vector<3x128xf32>
    %57 = math.exp %56 : vector<3x128xf32>
    %c0_13 = arith.constant 0 : index
    %58 = memref.load %arg4[%c0_13] : memref<8xf32, #tpu.memory_space<smem>>
    %59 = vector.broadcast %58 : f32 to vector<3x128xf32>
    %60 = arith.mulf %57, %59 : vector<3x128xf32>
    %61 = arith.addf %6, %60 : vector<3x128xf32>
    %c9 = arith.constant 9 : index
    %62 = memref.load %arg2[%c9] : memref<72xf32, #tpu.memory_space<smem>>
    %63 = vector.broadcast %62 : f32 to vector<3x128xf32>
    %64 = arith.mulf %1, %63 : vector<3x128xf32>
    %c10 = arith.constant 10 : index
    %65 = memref.load %arg2[%c10] : memref<72xf32, #tpu.memory_space<smem>>
    %66 = vector.broadcast %65 : f32 to vector<3x128xf32>
    %67 = arith.mulf %3, %66 : vector<3x128xf32>
    %68 = arith.addf %64, %67 : vector<3x128xf32>
    %c11 = arith.constant 11 : index
    %69 = memref.load %arg2[%c11] : memref<72xf32, #tpu.memory_space<smem>>
    %70 = vector.broadcast %69 : f32 to vector<3x128xf32>
    %71 = arith.mulf %5, %70 : vector<3x128xf32>
    %72 = arith.addf %68, %71 : vector<3x128xf32>
    %c3_14 = arith.constant 3 : index
    %73 = memref.load %arg3[%c3_14] : memref<24xf32, #tpu.memory_space<smem>>
    %74 = vector.broadcast %73 : f32 to vector<3x128xf32>
    %75 = arith.addf %72, %74 : vector<3x128xf32>
    %76 = arith.mulf %75, %75 : vector<3x128xf32>
    %c12 = arith.constant 12 : index
    %77 = memref.load %arg2[%c12] : memref<72xf32, #tpu.memory_space<smem>>
    %78 = vector.broadcast %77 : f32 to vector<3x128xf32>
    %79 = arith.mulf %1, %78 : vector<3x128xf32>
    %c13 = arith.constant 13 : index
    %80 = memref.load %arg2[%c13] : memref<72xf32, #tpu.memory_space<smem>>
    %81 = vector.broadcast %80 : f32 to vector<3x128xf32>
    %82 = arith.mulf %3, %81 : vector<3x128xf32>
    %83 = arith.addf %79, %82 : vector<3x128xf32>
    %c14 = arith.constant 14 : index
    %84 = memref.load %arg2[%c14] : memref<72xf32, #tpu.memory_space<smem>>
    %85 = vector.broadcast %84 : f32 to vector<3x128xf32>
    %86 = arith.mulf %5, %85 : vector<3x128xf32>
    %87 = arith.addf %83, %86 : vector<3x128xf32>
    %c4_15 = arith.constant 4 : index
    %88 = memref.load %arg3[%c4_15] : memref<24xf32, #tpu.memory_space<smem>>
    %89 = vector.broadcast %88 : f32 to vector<3x128xf32>
    %90 = arith.addf %87, %89 : vector<3x128xf32>
    %91 = arith.mulf %90, %90 : vector<3x128xf32>
    %92 = arith.addf %76, %91 : vector<3x128xf32>
    %c15 = arith.constant 15 : index
    %93 = memref.load %arg2[%c15] : memref<72xf32, #tpu.memory_space<smem>>
    %94 = vector.broadcast %93 : f32 to vector<3x128xf32>
    %95 = arith.mulf %1, %94 : vector<3x128xf32>
    %c16 = arith.constant 16 : index
    %96 = memref.load %arg2[%c16] : memref<72xf32, #tpu.memory_space<smem>>
    %97 = vector.broadcast %96 : f32 to vector<3x128xf32>
    %98 = arith.mulf %3, %97 : vector<3x128xf32>
    %99 = arith.addf %95, %98 : vector<3x128xf32>
    %c17 = arith.constant 17 : index
    %100 = memref.load %arg2[%c17] : memref<72xf32, #tpu.memory_space<smem>>
    %101 = vector.broadcast %100 : f32 to vector<3x128xf32>
    %102 = arith.mulf %5, %101 : vector<3x128xf32>
    %103 = arith.addf %99, %102 : vector<3x128xf32>
    %c5_16 = arith.constant 5 : index
    %104 = memref.load %arg3[%c5_16] : memref<24xf32, #tpu.memory_space<smem>>
    %105 = vector.broadcast %104 : f32 to vector<3x128xf32>
    %106 = arith.addf %103, %105 : vector<3x128xf32>
    %107 = arith.mulf %106, %106 : vector<3x128xf32>
    %108 = arith.addf %92, %107 : vector<3x128xf32>
    %109 = math.sqrt %108 : vector<3x128xf32>
    %cst_17 = arith.constant 0.000000e+00 : f32
    %110 = vector.broadcast %cst_17 : f32 to vector<3x128xf32>
    %111 = arith.subf %110, %109 : vector<3x128xf32>
    %112 = math.exp %111 : vector<3x128xf32>
    %c1_18 = arith.constant 1 : index
    %113 = memref.load %arg4[%c1_18] : memref<8xf32, #tpu.memory_space<smem>>
    %114 = vector.broadcast %113 : f32 to vector<3x128xf32>
    %115 = arith.mulf %112, %114 : vector<3x128xf32>
    %116 = arith.addf %61, %115 : vector<3x128xf32>
    %c18 = arith.constant 18 : index
    %117 = memref.load %arg2[%c18] : memref<72xf32, #tpu.memory_space<smem>>
    %118 = vector.broadcast %117 : f32 to vector<3x128xf32>
    %119 = arith.mulf %1, %118 : vector<3x128xf32>
    %c19 = arith.constant 19 : index
    %120 = memref.load %arg2[%c19] : memref<72xf32, #tpu.memory_space<smem>>
    %121 = vector.broadcast %120 : f32 to vector<3x128xf32>
    %122 = arith.mulf %3, %121 : vector<3x128xf32>
    %123 = arith.addf %119, %122 : vector<3x128xf32>
    %c20 = arith.constant 20 : index
    %124 = memref.load %arg2[%c20] : memref<72xf32, #tpu.memory_space<smem>>
    %125 = vector.broadcast %124 : f32 to vector<3x128xf32>
    %126 = arith.mulf %5, %125 : vector<3x128xf32>
    %127 = arith.addf %123, %126 : vector<3x128xf32>
    %c6_19 = arith.constant 6 : index
    %128 = memref.load %arg3[%c6_19] : memref<24xf32, #tpu.memory_space<smem>>
    %129 = vector.broadcast %128 : f32 to vector<3x128xf32>
    %130 = arith.addf %127, %129 : vector<3x128xf32>
    %131 = arith.mulf %130, %130 : vector<3x128xf32>
    %c21 = arith.constant 21 : index
    %132 = memref.load %arg2[%c21] : memref<72xf32, #tpu.memory_space<smem>>
    %133 = vector.broadcast %132 : f32 to vector<3x128xf32>
    %134 = arith.mulf %1, %133 : vector<3x128xf32>
    %c22 = arith.constant 22 : index
    %135 = memref.load %arg2[%c22] : memref<72xf32, #tpu.memory_space<smem>>
    %136 = vector.broadcast %135 : f32 to vector<3x128xf32>
    %137 = arith.mulf %3, %136 : vector<3x128xf32>
    %138 = arith.addf %134, %137 : vector<3x128xf32>
    %c23 = arith.constant 23 : index
    %139 = memref.load %arg2[%c23] : memref<72xf32, #tpu.memory_space<smem>>
    %140 = vector.broadcast %139 : f32 to vector<3x128xf32>
    %141 = arith.mulf %5, %140 : vector<3x128xf32>
    %142 = arith.addf %138, %141 : vector<3x128xf32>
    %c7_20 = arith.constant 7 : index
    %143 = memref.load %arg3[%c7_20] : memref<24xf32, #tpu.memory_space<smem>>
    %144 = vector.broadcast %143 : f32 to vector<3x128xf32>
    %145 = arith.addf %142, %144 : vector<3x128xf32>
    %146 = arith.mulf %145, %145 : vector<3x128xf32>
    %147 = arith.addf %131, %146 : vector<3x128xf32>
    %c24 = arith.constant 24 : index
    %148 = memref.load %arg2[%c24] : memref<72xf32, #tpu.memory_space<smem>>
    %149 = vector.broadcast %148 : f32 to vector<3x128xf32>
    %150 = arith.mulf %1, %149 : vector<3x128xf32>
    %c25 = arith.constant 25 : index
    %151 = memref.load %arg2[%c25] : memref<72xf32, #tpu.memory_space<smem>>
    %152 = vector.broadcast %151 : f32 to vector<3x128xf32>
    %153 = arith.mulf %3, %152 : vector<3x128xf32>
    %154 = arith.addf %150, %153 : vector<3x128xf32>
    %c26 = arith.constant 26 : index
    %155 = memref.load %arg2[%c26] : memref<72xf32, #tpu.memory_space<smem>>
    %156 = vector.broadcast %155 : f32 to vector<3x128xf32>
    %157 = arith.mulf %5, %156 : vector<3x128xf32>
    %158 = arith.addf %154, %157 : vector<3x128xf32>
    %c8_21 = arith.constant 8 : index
    %159 = memref.load %arg3[%c8_21] : memref<24xf32, #tpu.memory_space<smem>>
    %160 = vector.broadcast %159 : f32 to vector<3x128xf32>
    %161 = arith.addf %158, %160 : vector<3x128xf32>
    %162 = arith.mulf %161, %161 : vector<3x128xf32>
    %163 = arith.addf %147, %162 : vector<3x128xf32>
    %164 = math.sqrt %163 : vector<3x128xf32>
    %cst_22 = arith.constant 0.000000e+00 : f32
    %165 = vector.broadcast %cst_22 : f32 to vector<3x128xf32>
    %166 = arith.subf %165, %164 : vector<3x128xf32>
    %167 = math.exp %166 : vector<3x128xf32>
    %c2_23 = arith.constant 2 : index
    %168 = memref.load %arg4[%c2_23] : memref<8xf32, #tpu.memory_space<smem>>
    %169 = vector.broadcast %168 : f32 to vector<3x128xf32>
    %170 = arith.mulf %167, %169 : vector<3x128xf32>
    %171 = arith.addf %116, %170 : vector<3x128xf32>
    %c27 = arith.constant 27 : index
    %172 = memref.load %arg2[%c27] : memref<72xf32, #tpu.memory_space<smem>>
    %173 = vector.broadcast %172 : f32 to vector<3x128xf32>
    %174 = arith.mulf %1, %173 : vector<3x128xf32>
    %c28 = arith.constant 28 : index
    %175 = memref.load %arg2[%c28] : memref<72xf32, #tpu.memory_space<smem>>
    %176 = vector.broadcast %175 : f32 to vector<3x128xf32>
    %177 = arith.mulf %3, %176 : vector<3x128xf32>
    %178 = arith.addf %174, %177 : vector<3x128xf32>
    %c29 = arith.constant 29 : index
    %179 = memref.load %arg2[%c29] : memref<72xf32, #tpu.memory_space<smem>>
    %180 = vector.broadcast %179 : f32 to vector<3x128xf32>
    %181 = arith.mulf %5, %180 : vector<3x128xf32>
    %182 = arith.addf %178, %181 : vector<3x128xf32>
    %c9_24 = arith.constant 9 : index
    %183 = memref.load %arg3[%c9_24] : memref<24xf32, #tpu.memory_space<smem>>
    %184 = vector.broadcast %183 : f32 to vector<3x128xf32>
    %185 = arith.addf %182, %184 : vector<3x128xf32>
    %186 = arith.mulf %185, %185 : vector<3x128xf32>
    %c30 = arith.constant 30 : index
    %187 = memref.load %arg2[%c30] : memref<72xf32, #tpu.memory_space<smem>>
    %188 = vector.broadcast %187 : f32 to vector<3x128xf32>
    %189 = arith.mulf %1, %188 : vector<3x128xf32>
    %c31 = arith.constant 31 : index
    %190 = memref.load %arg2[%c31] : memref<72xf32, #tpu.memory_space<smem>>
    %191 = vector.broadcast %190 : f32 to vector<3x128xf32>
    %192 = arith.mulf %3, %191 : vector<3x128xf32>
    %193 = arith.addf %189, %192 : vector<3x128xf32>
    %c32 = arith.constant 32 : index
    %194 = memref.load %arg2[%c32] : memref<72xf32, #tpu.memory_space<smem>>
    %195 = vector.broadcast %194 : f32 to vector<3x128xf32>
    %196 = arith.mulf %5, %195 : vector<3x128xf32>
    %197 = arith.addf %193, %196 : vector<3x128xf32>
    %c10_25 = arith.constant 10 : index
    %198 = memref.load %arg3[%c10_25] : memref<24xf32, #tpu.memory_space<smem>>
    %199 = vector.broadcast %198 : f32 to vector<3x128xf32>
    %200 = arith.addf %197, %199 : vector<3x128xf32>
    %201 = arith.mulf %200, %200 : vector<3x128xf32>
    %202 = arith.addf %186, %201 : vector<3x128xf32>
    %c33 = arith.constant 33 : index
    %203 = memref.load %arg2[%c33] : memref<72xf32, #tpu.memory_space<smem>>
    %204 = vector.broadcast %203 : f32 to vector<3x128xf32>
    %205 = arith.mulf %1, %204 : vector<3x128xf32>
    %c34 = arith.constant 34 : index
    %206 = memref.load %arg2[%c34] : memref<72xf32, #tpu.memory_space<smem>>
    %207 = vector.broadcast %206 : f32 to vector<3x128xf32>
    %208 = arith.mulf %3, %207 : vector<3x128xf32>
    %209 = arith.addf %205, %208 : vector<3x128xf32>
    %c35 = arith.constant 35 : index
    %210 = memref.load %arg2[%c35] : memref<72xf32, #tpu.memory_space<smem>>
    %211 = vector.broadcast %210 : f32 to vector<3x128xf32>
    %212 = arith.mulf %5, %211 : vector<3x128xf32>
    %213 = arith.addf %209, %212 : vector<3x128xf32>
    %c11_26 = arith.constant 11 : index
    %214 = memref.load %arg3[%c11_26] : memref<24xf32, #tpu.memory_space<smem>>
    %215 = vector.broadcast %214 : f32 to vector<3x128xf32>
    %216 = arith.addf %213, %215 : vector<3x128xf32>
    %217 = arith.mulf %216, %216 : vector<3x128xf32>
    %218 = arith.addf %202, %217 : vector<3x128xf32>
    %219 = math.sqrt %218 : vector<3x128xf32>
    %cst_27 = arith.constant 0.000000e+00 : f32
    %220 = vector.broadcast %cst_27 : f32 to vector<3x128xf32>
    %221 = arith.subf %220, %219 : vector<3x128xf32>
    %222 = math.exp %221 : vector<3x128xf32>
    %c3_28 = arith.constant 3 : index
    %223 = memref.load %arg4[%c3_28] : memref<8xf32, #tpu.memory_space<smem>>
    %224 = vector.broadcast %223 : f32 to vector<3x128xf32>
    %225 = arith.mulf %222, %224 : vector<3x128xf32>
    %226 = arith.addf %171, %225 : vector<3x128xf32>
    %c36 = arith.constant 36 : index
    %227 = memref.load %arg2[%c36] : memref<72xf32, #tpu.memory_space<smem>>
    %228 = vector.broadcast %227 : f32 to vector<3x128xf32>
    %229 = arith.mulf %1, %228 : vector<3x128xf32>
    %c37 = arith.constant 37 : index
    %230 = memref.load %arg2[%c37] : memref<72xf32, #tpu.memory_space<smem>>
    %231 = vector.broadcast %230 : f32 to vector<3x128xf32>
    %232 = arith.mulf %3, %231 : vector<3x128xf32>
    %233 = arith.addf %229, %232 : vector<3x128xf32>
    %c38 = arith.constant 38 : index
    %234 = memref.load %arg2[%c38] : memref<72xf32, #tpu.memory_space<smem>>
    %235 = vector.broadcast %234 : f32 to vector<3x128xf32>
    %236 = arith.mulf %5, %235 : vector<3x128xf32>
    %237 = arith.addf %233, %236 : vector<3x128xf32>
    %c12_29 = arith.constant 12 : index
    %238 = memref.load %arg3[%c12_29] : memref<24xf32, #tpu.memory_space<smem>>
    %239 = vector.broadcast %238 : f32 to vector<3x128xf32>
    %240 = arith.addf %237, %239 : vector<3x128xf32>
    %241 = arith.mulf %240, %240 : vector<3x128xf32>
    %c39 = arith.constant 39 : index
    %242 = memref.load %arg2[%c39] : memref<72xf32, #tpu.memory_space<smem>>
    %243 = vector.broadcast %242 : f32 to vector<3x128xf32>
    %244 = arith.mulf %1, %243 : vector<3x128xf32>
    %c40 = arith.constant 40 : index
    %245 = memref.load %arg2[%c40] : memref<72xf32, #tpu.memory_space<smem>>
    %246 = vector.broadcast %245 : f32 to vector<3x128xf32>
    %247 = arith.mulf %3, %246 : vector<3x128xf32>
    %248 = arith.addf %244, %247 : vector<3x128xf32>
    %c41 = arith.constant 41 : index
    %249 = memref.load %arg2[%c41] : memref<72xf32, #tpu.memory_space<smem>>
    %250 = vector.broadcast %249 : f32 to vector<3x128xf32>
    %251 = arith.mulf %5, %250 : vector<3x128xf32>
    %252 = arith.addf %248, %251 : vector<3x128xf32>
    %c13_30 = arith.constant 13 : index
    %253 = memref.load %arg3[%c13_30] : memref<24xf32, #tpu.memory_space<smem>>
    %254 = vector.broadcast %253 : f32 to vector<3x128xf32>
    %255 = arith.addf %252, %254 : vector<3x128xf32>
    %256 = arith.mulf %255, %255 : vector<3x128xf32>
    %257 = arith.addf %241, %256 : vector<3x128xf32>
    %c42 = arith.constant 42 : index
    %258 = memref.load %arg2[%c42] : memref<72xf32, #tpu.memory_space<smem>>
    %259 = vector.broadcast %258 : f32 to vector<3x128xf32>
    %260 = arith.mulf %1, %259 : vector<3x128xf32>
    %c43 = arith.constant 43 : index
    %261 = memref.load %arg2[%c43] : memref<72xf32, #tpu.memory_space<smem>>
    %262 = vector.broadcast %261 : f32 to vector<3x128xf32>
    %263 = arith.mulf %3, %262 : vector<3x128xf32>
    %264 = arith.addf %260, %263 : vector<3x128xf32>
    %c44 = arith.constant 44 : index
    %265 = memref.load %arg2[%c44] : memref<72xf32, #tpu.memory_space<smem>>
    %266 = vector.broadcast %265 : f32 to vector<3x128xf32>
    %267 = arith.mulf %5, %266 : vector<3x128xf32>
    %268 = arith.addf %264, %267 : vector<3x128xf32>
    %c14_31 = arith.constant 14 : index
    %269 = memref.load %arg3[%c14_31] : memref<24xf32, #tpu.memory_space<smem>>
    %270 = vector.broadcast %269 : f32 to vector<3x128xf32>
    %271 = arith.addf %268, %270 : vector<3x128xf32>
    %272 = arith.mulf %271, %271 : vector<3x128xf32>
    %273 = arith.addf %257, %272 : vector<3x128xf32>
    %274 = math.sqrt %273 : vector<3x128xf32>
    %cst_32 = arith.constant 0.000000e+00 : f32
    %275 = vector.broadcast %cst_32 : f32 to vector<3x128xf32>
    %276 = arith.subf %275, %274 : vector<3x128xf32>
    %277 = math.exp %276 : vector<3x128xf32>
    %c4_33 = arith.constant 4 : index
    %278 = memref.load %arg4[%c4_33] : memref<8xf32, #tpu.memory_space<smem>>
    %279 = vector.broadcast %278 : f32 to vector<3x128xf32>
    %280 = arith.mulf %277, %279 : vector<3x128xf32>
    %281 = arith.addf %226, %280 : vector<3x128xf32>
    %c45 = arith.constant 45 : index
    %282 = memref.load %arg2[%c45] : memref<72xf32, #tpu.memory_space<smem>>
    %283 = vector.broadcast %282 : f32 to vector<3x128xf32>
    %284 = arith.mulf %1, %283 : vector<3x128xf32>
    %c46 = arith.constant 46 : index
    %285 = memref.load %arg2[%c46] : memref<72xf32, #tpu.memory_space<smem>>
    %286 = vector.broadcast %285 : f32 to vector<3x128xf32>
    %287 = arith.mulf %3, %286 : vector<3x128xf32>
    %288 = arith.addf %284, %287 : vector<3x128xf32>
    %c47 = arith.constant 47 : index
    %289 = memref.load %arg2[%c47] : memref<72xf32, #tpu.memory_space<smem>>
    %290 = vector.broadcast %289 : f32 to vector<3x128xf32>
    %291 = arith.mulf %5, %290 : vector<3x128xf32>
    %292 = arith.addf %288, %291 : vector<3x128xf32>
    %c15_34 = arith.constant 15 : index
    %293 = memref.load %arg3[%c15_34] : memref<24xf32, #tpu.memory_space<smem>>
    %294 = vector.broadcast %293 : f32 to vector<3x128xf32>
    %295 = arith.addf %292, %294 : vector<3x128xf32>
    %296 = arith.mulf %295, %295 : vector<3x128xf32>
    %c48 = arith.constant 48 : index
    %297 = memref.load %arg2[%c48] : memref<72xf32, #tpu.memory_space<smem>>
    %298 = vector.broadcast %297 : f32 to vector<3x128xf32>
    %299 = arith.mulf %1, %298 : vector<3x128xf32>
    %c49 = arith.constant 49 : index
    %300 = memref.load %arg2[%c49] : memref<72xf32, #tpu.memory_space<smem>>
    %301 = vector.broadcast %300 : f32 to vector<3x128xf32>
    %302 = arith.mulf %3, %301 : vector<3x128xf32>
    %303 = arith.addf %299, %302 : vector<3x128xf32>
    %c50 = arith.constant 50 : index
    %304 = memref.load %arg2[%c50] : memref<72xf32, #tpu.memory_space<smem>>
    %305 = vector.broadcast %304 : f32 to vector<3x128xf32>
    %306 = arith.mulf %5, %305 : vector<3x128xf32>
    %307 = arith.addf %303, %306 : vector<3x128xf32>
    %c16_35 = arith.constant 16 : index
    %308 = memref.load %arg3[%c16_35] : memref<24xf32, #tpu.memory_space<smem>>
    %309 = vector.broadcast %308 : f32 to vector<3x128xf32>
    %310 = arith.addf %307, %309 : vector<3x128xf32>
    %311 = arith.mulf %310, %310 : vector<3x128xf32>
    %312 = arith.addf %296, %311 : vector<3x128xf32>
    %c51 = arith.constant 51 : index
    %313 = memref.load %arg2[%c51] : memref<72xf32, #tpu.memory_space<smem>>
    %314 = vector.broadcast %313 : f32 to vector<3x128xf32>
    %315 = arith.mulf %1, %314 : vector<3x128xf32>
    %c52 = arith.constant 52 : index
    %316 = memref.load %arg2[%c52] : memref<72xf32, #tpu.memory_space<smem>>
    %317 = vector.broadcast %316 : f32 to vector<3x128xf32>
    %318 = arith.mulf %3, %317 : vector<3x128xf32>
    %319 = arith.addf %315, %318 : vector<3x128xf32>
    %c53 = arith.constant 53 : index
    %320 = memref.load %arg2[%c53] : memref<72xf32, #tpu.memory_space<smem>>
    %321 = vector.broadcast %320 : f32 to vector<3x128xf32>
    %322 = arith.mulf %5, %321 : vector<3x128xf32>
    %323 = arith.addf %319, %322 : vector<3x128xf32>
    %c17_36 = arith.constant 17 : index
    %324 = memref.load %arg3[%c17_36] : memref<24xf32, #tpu.memory_space<smem>>
    %325 = vector.broadcast %324 : f32 to vector<3x128xf32>
    %326 = arith.addf %323, %325 : vector<3x128xf32>
    %327 = arith.mulf %326, %326 : vector<3x128xf32>
    %328 = arith.addf %312, %327 : vector<3x128xf32>
    %329 = math.sqrt %328 : vector<3x128xf32>
    %cst_37 = arith.constant 0.000000e+00 : f32
    %330 = vector.broadcast %cst_37 : f32 to vector<3x128xf32>
    %331 = arith.subf %330, %329 : vector<3x128xf32>
    %332 = math.exp %331 : vector<3x128xf32>
    %c5_38 = arith.constant 5 : index
    %333 = memref.load %arg4[%c5_38] : memref<8xf32, #tpu.memory_space<smem>>
    %334 = vector.broadcast %333 : f32 to vector<3x128xf32>
    %335 = arith.mulf %332, %334 : vector<3x128xf32>
    %336 = arith.addf %281, %335 : vector<3x128xf32>
    %c54 = arith.constant 54 : index
    %337 = memref.load %arg2[%c54] : memref<72xf32, #tpu.memory_space<smem>>
    %338 = vector.broadcast %337 : f32 to vector<3x128xf32>
    %339 = arith.mulf %1, %338 : vector<3x128xf32>
    %c55 = arith.constant 55 : index
    %340 = memref.load %arg2[%c55] : memref<72xf32, #tpu.memory_space<smem>>
    %341 = vector.broadcast %340 : f32 to vector<3x128xf32>
    %342 = arith.mulf %3, %341 : vector<3x128xf32>
    %343 = arith.addf %339, %342 : vector<3x128xf32>
    %c56 = arith.constant 56 : index
    %344 = memref.load %arg2[%c56] : memref<72xf32, #tpu.memory_space<smem>>
    %345 = vector.broadcast %344 : f32 to vector<3x128xf32>
    %346 = arith.mulf %5, %345 : vector<3x128xf32>
    %347 = arith.addf %343, %346 : vector<3x128xf32>
    %c18_39 = arith.constant 18 : index
    %348 = memref.load %arg3[%c18_39] : memref<24xf32, #tpu.memory_space<smem>>
    %349 = vector.broadcast %348 : f32 to vector<3x128xf32>
    %350 = arith.addf %347, %349 : vector<3x128xf32>
    %351 = arith.mulf %350, %350 : vector<3x128xf32>
    %c57 = arith.constant 57 : index
    %352 = memref.load %arg2[%c57] : memref<72xf32, #tpu.memory_space<smem>>
    %353 = vector.broadcast %352 : f32 to vector<3x128xf32>
    %354 = arith.mulf %1, %353 : vector<3x128xf32>
    %c58 = arith.constant 58 : index
    %355 = memref.load %arg2[%c58] : memref<72xf32, #tpu.memory_space<smem>>
    %356 = vector.broadcast %355 : f32 to vector<3x128xf32>
    %357 = arith.mulf %3, %356 : vector<3x128xf32>
    %358 = arith.addf %354, %357 : vector<3x128xf32>
    %c59 = arith.constant 59 : index
    %359 = memref.load %arg2[%c59] : memref<72xf32, #tpu.memory_space<smem>>
    %360 = vector.broadcast %359 : f32 to vector<3x128xf32>
    %361 = arith.mulf %5, %360 : vector<3x128xf32>
    %362 = arith.addf %358, %361 : vector<3x128xf32>
    %c19_40 = arith.constant 19 : index
    %363 = memref.load %arg3[%c19_40] : memref<24xf32, #tpu.memory_space<smem>>
    %364 = vector.broadcast %363 : f32 to vector<3x128xf32>
    %365 = arith.addf %362, %364 : vector<3x128xf32>
    %366 = arith.mulf %365, %365 : vector<3x128xf32>
    %367 = arith.addf %351, %366 : vector<3x128xf32>
    %c60 = arith.constant 60 : index
    %368 = memref.load %arg2[%c60] : memref<72xf32, #tpu.memory_space<smem>>
    %369 = vector.broadcast %368 : f32 to vector<3x128xf32>
    %370 = arith.mulf %1, %369 : vector<3x128xf32>
    %c61 = arith.constant 61 : index
    %371 = memref.load %arg2[%c61] : memref<72xf32, #tpu.memory_space<smem>>
    %372 = vector.broadcast %371 : f32 to vector<3x128xf32>
    %373 = arith.mulf %3, %372 : vector<3x128xf32>
    %374 = arith.addf %370, %373 : vector<3x128xf32>
    %c62 = arith.constant 62 : index
    %375 = memref.load %arg2[%c62] : memref<72xf32, #tpu.memory_space<smem>>
    %376 = vector.broadcast %375 : f32 to vector<3x128xf32>
    %377 = arith.mulf %5, %376 : vector<3x128xf32>
    %378 = arith.addf %374, %377 : vector<3x128xf32>
    %c20_41 = arith.constant 20 : index
    %379 = memref.load %arg3[%c20_41] : memref<24xf32, #tpu.memory_space<smem>>
    %380 = vector.broadcast %379 : f32 to vector<3x128xf32>
    %381 = arith.addf %378, %380 : vector<3x128xf32>
    %382 = arith.mulf %381, %381 : vector<3x128xf32>
    %383 = arith.addf %367, %382 : vector<3x128xf32>
    %384 = math.sqrt %383 : vector<3x128xf32>
    %cst_42 = arith.constant 0.000000e+00 : f32
    %385 = vector.broadcast %cst_42 : f32 to vector<3x128xf32>
    %386 = arith.subf %385, %384 : vector<3x128xf32>
    %387 = math.exp %386 : vector<3x128xf32>
    %c6_43 = arith.constant 6 : index
    %388 = memref.load %arg4[%c6_43] : memref<8xf32, #tpu.memory_space<smem>>
    %389 = vector.broadcast %388 : f32 to vector<3x128xf32>
    %390 = arith.mulf %387, %389 : vector<3x128xf32>
    %391 = arith.addf %336, %390 : vector<3x128xf32>
    %c63 = arith.constant 63 : index
    %392 = memref.load %arg2[%c63] : memref<72xf32, #tpu.memory_space<smem>>
    %393 = vector.broadcast %392 : f32 to vector<3x128xf32>
    %394 = arith.mulf %1, %393 : vector<3x128xf32>
    %c64 = arith.constant 64 : index
    %395 = memref.load %arg2[%c64] : memref<72xf32, #tpu.memory_space<smem>>
    %396 = vector.broadcast %395 : f32 to vector<3x128xf32>
    %397 = arith.mulf %3, %396 : vector<3x128xf32>
    %398 = arith.addf %394, %397 : vector<3x128xf32>
    %c65 = arith.constant 65 : index
    %399 = memref.load %arg2[%c65] : memref<72xf32, #tpu.memory_space<smem>>
    %400 = vector.broadcast %399 : f32 to vector<3x128xf32>
    %401 = arith.mulf %5, %400 : vector<3x128xf32>
    %402 = arith.addf %398, %401 : vector<3x128xf32>
    %c21_44 = arith.constant 21 : index
    %403 = memref.load %arg3[%c21_44] : memref<24xf32, #tpu.memory_space<smem>>
    %404 = vector.broadcast %403 : f32 to vector<3x128xf32>
    %405 = arith.addf %402, %404 : vector<3x128xf32>
    %406 = arith.mulf %405, %405 : vector<3x128xf32>
    %c66 = arith.constant 66 : index
    %407 = memref.load %arg2[%c66] : memref<72xf32, #tpu.memory_space<smem>>
    %408 = vector.broadcast %407 : f32 to vector<3x128xf32>
    %409 = arith.mulf %1, %408 : vector<3x128xf32>
    %c67 = arith.constant 67 : index
    %410 = memref.load %arg2[%c67] : memref<72xf32, #tpu.memory_space<smem>>
    %411 = vector.broadcast %410 : f32 to vector<3x128xf32>
    %412 = arith.mulf %3, %411 : vector<3x128xf32>
    %413 = arith.addf %409, %412 : vector<3x128xf32>
    %c68 = arith.constant 68 : index
    %414 = memref.load %arg2[%c68] : memref<72xf32, #tpu.memory_space<smem>>
    %415 = vector.broadcast %414 : f32 to vector<3x128xf32>
    %416 = arith.mulf %5, %415 : vector<3x128xf32>
    %417 = arith.addf %413, %416 : vector<3x128xf32>
    %c22_45 = arith.constant 22 : index
    %418 = memref.load %arg3[%c22_45] : memref<24xf32, #tpu.memory_space<smem>>
    %419 = vector.broadcast %418 : f32 to vector<3x128xf32>
    %420 = arith.addf %417, %419 : vector<3x128xf32>
    %421 = arith.mulf %420, %420 : vector<3x128xf32>
    %422 = arith.addf %406, %421 : vector<3x128xf32>
    %c69 = arith.constant 69 : index
    %423 = memref.load %arg2[%c69] : memref<72xf32, #tpu.memory_space<smem>>
    %424 = vector.broadcast %423 : f32 to vector<3x128xf32>
    %425 = arith.mulf %1, %424 : vector<3x128xf32>
    %c70 = arith.constant 70 : index
    %426 = memref.load %arg2[%c70] : memref<72xf32, #tpu.memory_space<smem>>
    %427 = vector.broadcast %426 : f32 to vector<3x128xf32>
    %428 = arith.mulf %3, %427 : vector<3x128xf32>
    %429 = arith.addf %425, %428 : vector<3x128xf32>
    %c71 = arith.constant 71 : index
    %430 = memref.load %arg2[%c71] : memref<72xf32, #tpu.memory_space<smem>>
    %431 = vector.broadcast %430 : f32 to vector<3x128xf32>
    %432 = arith.mulf %5, %431 : vector<3x128xf32>
    %433 = arith.addf %429, %432 : vector<3x128xf32>
    %c23_46 = arith.constant 23 : index
    %434 = memref.load %arg3[%c23_46] : memref<24xf32, #tpu.memory_space<smem>>
    %435 = vector.broadcast %434 : f32 to vector<3x128xf32>
    %436 = arith.addf %433, %435 : vector<3x128xf32>
    %437 = arith.mulf %436, %436 : vector<3x128xf32>
    %438 = arith.addf %422, %437 : vector<3x128xf32>
    %439 = math.sqrt %438 : vector<3x128xf32>
    %cst_47 = arith.constant 0.000000e+00 : f32
    %440 = vector.broadcast %cst_47 : f32 to vector<3x128xf32>
    %441 = arith.subf %440, %439 : vector<3x128xf32>
    %442 = math.exp %441 : vector<3x128xf32>
    %c7_48 = arith.constant 7 : index
    %443 = memref.load %arg4[%c7_48] : memref<8xf32, #tpu.memory_space<smem>>
    %444 = vector.broadcast %443 : f32 to vector<3x128xf32>
    %445 = arith.mulf %442, %444 : vector<3x128xf32>
    %446 = arith.addf %391, %445 : vector<3x128xf32>
    %c0_49 = arith.constant 0 : index
    %447 = memref.load %arg5[%c0_49] : memref<36xf32, #tpu.memory_space<smem>>
    %448 = vector.broadcast %447 : f32 to vector<3x128xf32>
    %449 = arith.mulf %1, %448 : vector<3x128xf32>
    %c1_50 = arith.constant 1 : index
    %450 = memref.load %arg5[%c1_50] : memref<36xf32, #tpu.memory_space<smem>>
    %451 = vector.broadcast %450 : f32 to vector<3x128xf32>
    %452 = arith.mulf %3, %451 : vector<3x128xf32>
    %453 = arith.addf %449, %452 : vector<3x128xf32>
    %c2_51 = arith.constant 2 : index
    %454 = memref.load %arg5[%c2_51] : memref<36xf32, #tpu.memory_space<smem>>
    %455 = vector.broadcast %454 : f32 to vector<3x128xf32>
    %456 = arith.mulf %5, %455 : vector<3x128xf32>
    %457 = arith.addf %453, %456 : vector<3x128xf32>
    %c0_52 = arith.constant 0 : index
    %458 = memref.load %arg6[%c0_52] : memref<12xf32, #tpu.memory_space<smem>>
    %459 = vector.broadcast %458 : f32 to vector<3x128xf32>
    %460 = arith.addf %457, %459 : vector<3x128xf32>
    %461 = arith.mulf %460, %460 : vector<3x128xf32>
    %c3_53 = arith.constant 3 : index
    %462 = memref.load %arg5[%c3_53] : memref<36xf32, #tpu.memory_space<smem>>
    %463 = vector.broadcast %462 : f32 to vector<3x128xf32>
    %464 = arith.mulf %1, %463 : vector<3x128xf32>
    %c4_54 = arith.constant 4 : index
    %465 = memref.load %arg5[%c4_54] : memref<36xf32, #tpu.memory_space<smem>>
    %466 = vector.broadcast %465 : f32 to vector<3x128xf32>
    %467 = arith.mulf %3, %466 : vector<3x128xf32>
    %468 = arith.addf %464, %467 : vector<3x128xf32>
    %c5_55 = arith.constant 5 : index
    %469 = memref.load %arg5[%c5_55] : memref<36xf32, #tpu.memory_space<smem>>
    %470 = vector.broadcast %469 : f32 to vector<3x128xf32>
    %471 = arith.mulf %5, %470 : vector<3x128xf32>
    %472 = arith.addf %468, %471 : vector<3x128xf32>
    %c1_56 = arith.constant 1 : index
    %473 = memref.load %arg6[%c1_56] : memref<12xf32, #tpu.memory_space<smem>>
    %474 = vector.broadcast %473 : f32 to vector<3x128xf32>
    %475 = arith.addf %472, %474 : vector<3x128xf32>
    %476 = arith.mulf %475, %475 : vector<3x128xf32>
    %477 = arith.addf %461, %476 : vector<3x128xf32>
    %c6_57 = arith.constant 6 : index
    %478 = memref.load %arg5[%c6_57] : memref<36xf32, #tpu.memory_space<smem>>
    %479 = vector.broadcast %478 : f32 to vector<3x128xf32>
    %480 = arith.mulf %1, %479 : vector<3x128xf32>
    %c7_58 = arith.constant 7 : index
    %481 = memref.load %arg5[%c7_58] : memref<36xf32, #tpu.memory_space<smem>>
    %482 = vector.broadcast %481 : f32 to vector<3x128xf32>
    %483 = arith.mulf %3, %482 : vector<3x128xf32>
    %484 = arith.addf %480, %483 : vector<3x128xf32>
    %c8_59 = arith.constant 8 : index
    %485 = memref.load %arg5[%c8_59] : memref<36xf32, #tpu.memory_space<smem>>
    %486 = vector.broadcast %485 : f32 to vector<3x128xf32>
    %487 = arith.mulf %5, %486 : vector<3x128xf32>
    %488 = arith.addf %484, %487 : vector<3x128xf32>
    %c2_60 = arith.constant 2 : index
    %489 = memref.load %arg6[%c2_60] : memref<12xf32, #tpu.memory_space<smem>>
    %490 = vector.broadcast %489 : f32 to vector<3x128xf32>
    %491 = arith.addf %488, %490 : vector<3x128xf32>
    %492 = arith.mulf %491, %491 : vector<3x128xf32>
    %493 = arith.addf %477, %492 : vector<3x128xf32>
    %494 = math.sqrt %493 : vector<3x128xf32>
    %495 = arith.addf %446, %494 : vector<3x128xf32>
    %c9_61 = arith.constant 9 : index
    %496 = memref.load %arg5[%c9_61] : memref<36xf32, #tpu.memory_space<smem>>
    %497 = vector.broadcast %496 : f32 to vector<3x128xf32>
    %498 = arith.mulf %1, %497 : vector<3x128xf32>
    %c10_62 = arith.constant 10 : index
    %499 = memref.load %arg5[%c10_62] : memref<36xf32, #tpu.memory_space<smem>>
    %500 = vector.broadcast %499 : f32 to vector<3x128xf32>
    %501 = arith.mulf %3, %500 : vector<3x128xf32>
    %502 = arith.addf %498, %501 : vector<3x128xf32>
    %c11_63 = arith.constant 11 : index
    %503 = memref.load %arg5[%c11_63] : memref<36xf32, #tpu.memory_space<smem>>
    %504 = vector.broadcast %503 : f32 to vector<3x128xf32>
    %505 = arith.mulf %5, %504 : vector<3x128xf32>
    %506 = arith.addf %502, %505 : vector<3x128xf32>
    %c3_64 = arith.constant 3 : index
    %507 = memref.load %arg6[%c3_64] : memref<12xf32, #tpu.memory_space<smem>>
    %508 = vector.broadcast %507 : f32 to vector<3x128xf32>
    %509 = arith.addf %506, %508 : vector<3x128xf32>
    %510 = arith.mulf %509, %509 : vector<3x128xf32>
    %c12_65 = arith.constant 12 : index
    %511 = memref.load %arg5[%c12_65] : memref<36xf32, #tpu.memory_space<smem>>
    %512 = vector.broadcast %511 : f32 to vector<3x128xf32>
    %513 = arith.mulf %1, %512 : vector<3x128xf32>
    %c13_66 = arith.constant 13 : index
    %514 = memref.load %arg5[%c13_66] : memref<36xf32, #tpu.memory_space<smem>>
    %515 = vector.broadcast %514 : f32 to vector<3x128xf32>
    %516 = arith.mulf %3, %515 : vector<3x128xf32>
    %517 = arith.addf %513, %516 : vector<3x128xf32>
    %c14_67 = arith.constant 14 : index
    %518 = memref.load %arg5[%c14_67] : memref<36xf32, #tpu.memory_space<smem>>
    %519 = vector.broadcast %518 : f32 to vector<3x128xf32>
    %520 = arith.mulf %5, %519 : vector<3x128xf32>
    %521 = arith.addf %517, %520 : vector<3x128xf32>
    %c4_68 = arith.constant 4 : index
    %522 = memref.load %arg6[%c4_68] : memref<12xf32, #tpu.memory_space<smem>>
    %523 = vector.broadcast %522 : f32 to vector<3x128xf32>
    %524 = arith.addf %521, %523 : vector<3x128xf32>
    %525 = arith.mulf %524, %524 : vector<3x128xf32>
    %526 = arith.addf %510, %525 : vector<3x128xf32>
    %c15_69 = arith.constant 15 : index
    %527 = memref.load %arg5[%c15_69] : memref<36xf32, #tpu.memory_space<smem>>
    %528 = vector.broadcast %527 : f32 to vector<3x128xf32>
    %529 = arith.mulf %1, %528 : vector<3x128xf32>
    %c16_70 = arith.constant 16 : index
    %530 = memref.load %arg5[%c16_70] : memref<36xf32, #tpu.memory_space<smem>>
    %531 = vector.broadcast %530 : f32 to vector<3x128xf32>
    %532 = arith.mulf %3, %531 : vector<3x128xf32>
    %533 = arith.addf %529, %532 : vector<3x128xf32>
    %c17_71 = arith.constant 17 : index
    %534 = memref.load %arg5[%c17_71] : memref<36xf32, #tpu.memory_space<smem>>
    %535 = vector.broadcast %534 : f32 to vector<3x128xf32>
    %536 = arith.mulf %5, %535 : vector<3x128xf32>
    %537 = arith.addf %533, %536 : vector<3x128xf32>
    %c5_72 = arith.constant 5 : index
    %538 = memref.load %arg6[%c5_72] : memref<12xf32, #tpu.memory_space<smem>>
    %539 = vector.broadcast %538 : f32 to vector<3x128xf32>
    %540 = arith.addf %537, %539 : vector<3x128xf32>
    %541 = arith.mulf %540, %540 : vector<3x128xf32>
    %542 = arith.addf %526, %541 : vector<3x128xf32>
    %543 = math.sqrt %542 : vector<3x128xf32>
    %544 = arith.addf %495, %543 : vector<3x128xf32>
    %c18_73 = arith.constant 18 : index
    %545 = memref.load %arg5[%c18_73] : memref<36xf32, #tpu.memory_space<smem>>
    %546 = vector.broadcast %545 : f32 to vector<3x128xf32>
    %547 = arith.mulf %1, %546 : vector<3x128xf32>
    %c19_74 = arith.constant 19 : index
    %548 = memref.load %arg5[%c19_74] : memref<36xf32, #tpu.memory_space<smem>>
    %549 = vector.broadcast %548 : f32 to vector<3x128xf32>
    %550 = arith.mulf %3, %549 : vector<3x128xf32>
    %551 = arith.addf %547, %550 : vector<3x128xf32>
    %c20_75 = arith.constant 20 : index
    %552 = memref.load %arg5[%c20_75] : memref<36xf32, #tpu.memory_space<smem>>
    %553 = vector.broadcast %552 : f32 to vector<3x128xf32>
    %554 = arith.mulf %5, %553 : vector<3x128xf32>
    %555 = arith.addf %551, %554 : vector<3x128xf32>
    %c6_76 = arith.constant 6 : index
    %556 = memref.load %arg6[%c6_76] : memref<12xf32, #tpu.memory_space<smem>>
    %557 = vector.broadcast %556 : f32 to vector<3x128xf32>
    %558 = arith.addf %555, %557 : vector<3x128xf32>
    %559 = arith.mulf %558, %558 : vector<3x128xf32>
    %c21_77 = arith.constant 21 : index
    %560 = memref.load %arg5[%c21_77] : memref<36xf32, #tpu.memory_space<smem>>
    %561 = vector.broadcast %560 : f32 to vector<3x128xf32>
    %562 = arith.mulf %1, %561 : vector<3x128xf32>
    %c22_78 = arith.constant 22 : index
    %563 = memref.load %arg5[%c22_78] : memref<36xf32, #tpu.memory_space<smem>>
    %564 = vector.broadcast %563 : f32 to vector<3x128xf32>
    %565 = arith.mulf %3, %564 : vector<3x128xf32>
    %566 = arith.addf %562, %565 : vector<3x128xf32>
    %c23_79 = arith.constant 23 : index
    %567 = memref.load %arg5[%c23_79] : memref<36xf32, #tpu.memory_space<smem>>
    %568 = vector.broadcast %567 : f32 to vector<3x128xf32>
    %569 = arith.mulf %5, %568 : vector<3x128xf32>
    %570 = arith.addf %566, %569 : vector<3x128xf32>
    %c7_80 = arith.constant 7 : index
    %571 = memref.load %arg6[%c7_80] : memref<12xf32, #tpu.memory_space<smem>>
    %572 = vector.broadcast %571 : f32 to vector<3x128xf32>
    %573 = arith.addf %570, %572 : vector<3x128xf32>
    %574 = arith.mulf %573, %573 : vector<3x128xf32>
    %575 = arith.addf %559, %574 : vector<3x128xf32>
    %c24_81 = arith.constant 24 : index
    %576 = memref.load %arg5[%c24_81] : memref<36xf32, #tpu.memory_space<smem>>
    %577 = vector.broadcast %576 : f32 to vector<3x128xf32>
    %578 = arith.mulf %1, %577 : vector<3x128xf32>
    %c25_82 = arith.constant 25 : index
    %579 = memref.load %arg5[%c25_82] : memref<36xf32, #tpu.memory_space<smem>>
    %580 = vector.broadcast %579 : f32 to vector<3x128xf32>
    %581 = arith.mulf %3, %580 : vector<3x128xf32>
    %582 = arith.addf %578, %581 : vector<3x128xf32>
    %c26_83 = arith.constant 26 : index
    %583 = memref.load %arg5[%c26_83] : memref<36xf32, #tpu.memory_space<smem>>
    %584 = vector.broadcast %583 : f32 to vector<3x128xf32>
    %585 = arith.mulf %5, %584 : vector<3x128xf32>
    %586 = arith.addf %582, %585 : vector<3x128xf32>
    %c8_84 = arith.constant 8 : index
    %587 = memref.load %arg6[%c8_84] : memref<12xf32, #tpu.memory_space<smem>>
    %588 = vector.broadcast %587 : f32 to vector<3x128xf32>
    %589 = arith.addf %586, %588 : vector<3x128xf32>
    %590 = arith.mulf %589, %589 : vector<3x128xf32>
    %591 = arith.addf %575, %590 : vector<3x128xf32>
    %592 = math.sqrt %591 : vector<3x128xf32>
    %593 = arith.addf %544, %592 : vector<3x128xf32>
    %c27_85 = arith.constant 27 : index
    %594 = memref.load %arg5[%c27_85] : memref<36xf32, #tpu.memory_space<smem>>
    %595 = vector.broadcast %594 : f32 to vector<3x128xf32>
    %596 = arith.mulf %1, %595 : vector<3x128xf32>
    %c28_86 = arith.constant 28 : index
    %597 = memref.load %arg5[%c28_86] : memref<36xf32, #tpu.memory_space<smem>>
    %598 = vector.broadcast %597 : f32 to vector<3x128xf32>
    %599 = arith.mulf %3, %598 : vector<3x128xf32>
    %600 = arith.addf %596, %599 : vector<3x128xf32>
    %c29_87 = arith.constant 29 : index
    %601 = memref.load %arg5[%c29_87] : memref<36xf32, #tpu.memory_space<smem>>
    %602 = vector.broadcast %601 : f32 to vector<3x128xf32>
    %603 = arith.mulf %5, %602 : vector<3x128xf32>
    %604 = arith.addf %600, %603 : vector<3x128xf32>
    %c9_88 = arith.constant 9 : index
    %605 = memref.load %arg6[%c9_88] : memref<12xf32, #tpu.memory_space<smem>>
    %606 = vector.broadcast %605 : f32 to vector<3x128xf32>
    %607 = arith.addf %604, %606 : vector<3x128xf32>
    %608 = arith.mulf %607, %607 : vector<3x128xf32>
    %c30_89 = arith.constant 30 : index
    %609 = memref.load %arg5[%c30_89] : memref<36xf32, #tpu.memory_space<smem>>
    %610 = vector.broadcast %609 : f32 to vector<3x128xf32>
    %611 = arith.mulf %1, %610 : vector<3x128xf32>
    %c31_90 = arith.constant 31 : index
    %612 = memref.load %arg5[%c31_90] : memref<36xf32, #tpu.memory_space<smem>>
    %613 = vector.broadcast %612 : f32 to vector<3x128xf32>
    %614 = arith.mulf %3, %613 : vector<3x128xf32>
    %615 = arith.addf %611, %614 : vector<3x128xf32>
    %c32_91 = arith.constant 32 : index
    %616 = memref.load %arg5[%c32_91] : memref<36xf32, #tpu.memory_space<smem>>
    %617 = vector.broadcast %616 : f32 to vector<3x128xf32>
    %618 = arith.mulf %5, %617 : vector<3x128xf32>
    %619 = arith.addf %615, %618 : vector<3x128xf32>
    %c10_92 = arith.constant 10 : index
    %620 = memref.load %arg6[%c10_92] : memref<12xf32, #tpu.memory_space<smem>>
    %621 = vector.broadcast %620 : f32 to vector<3x128xf32>
    %622 = arith.addf %619, %621 : vector<3x128xf32>
    %623 = arith.mulf %622, %622 : vector<3x128xf32>
    %624 = arith.addf %608, %623 : vector<3x128xf32>
    %c33_93 = arith.constant 33 : index
    %625 = memref.load %arg5[%c33_93] : memref<36xf32, #tpu.memory_space<smem>>
    %626 = vector.broadcast %625 : f32 to vector<3x128xf32>
    %627 = arith.mulf %1, %626 : vector<3x128xf32>
    %c34_94 = arith.constant 34 : index
    %628 = memref.load %arg5[%c34_94] : memref<36xf32, #tpu.memory_space<smem>>
    %629 = vector.broadcast %628 : f32 to vector<3x128xf32>
    %630 = arith.mulf %3, %629 : vector<3x128xf32>
    %631 = arith.addf %627, %630 : vector<3x128xf32>
    %c35_95 = arith.constant 35 : index
    %632 = memref.load %arg5[%c35_95] : memref<36xf32, #tpu.memory_space<smem>>
    %633 = vector.broadcast %632 : f32 to vector<3x128xf32>
    %634 = arith.mulf %5, %633 : vector<3x128xf32>
    %635 = arith.addf %631, %634 : vector<3x128xf32>
    %c11_96 = arith.constant 11 : index
    %636 = memref.load %arg6[%c11_96] : memref<12xf32, #tpu.memory_space<smem>>
    %637 = vector.broadcast %636 : f32 to vector<3x128xf32>
    %638 = arith.addf %635, %637 : vector<3x128xf32>
    %639 = arith.mulf %638, %638 : vector<3x128xf32>
    %640 = arith.addf %624, %639 : vector<3x128xf32>
    %641 = math.sqrt %640 : vector<3x128xf32>
    %642 = arith.addf %593, %641 : vector<3x128xf32>
    %c0_97 = arith.constant 0 : index
    %c0_98 = arith.constant 0 : index
    %643 = vector.load %arg7[%c0_97, %c0_98] : memref<3x128xf32, #tpu.memory_space<vmem>>, vector<3x128xf32>
    tpu.vector_store %arg7[%c0_97, %c0_98], %642 {strides = array<i32>} : memref<3x128xf32, #tpu.memory_space<vmem>>, vector<3x128xf32>,
    return
  }
  func.func @transform_0(%arg0: i32) -> (i32, i32, i32) {
    %c0_i32 = arith.constant 0 : i32
    %c0_i32_0 = arith.constant 0 : i32
    %c0_i32_1 = arith.constant 0 : i32
    return %c0_i32, %arg0, %c0_i32_0 : i32, i32, i32
  }
  func.func @transform_1(%arg0: i32) -> i32 {
    %c0_i32 = arith.constant 0 : i32
    %c0_i32_0 = arith.constant 0 : i32
    return %c0_i32 : i32
  }
  func.func @transform_2(%arg0: i32) -> i32 {
    %c0_i32 = arith.constant 0 : i32
    %c0_i32_0 = arith.constant 0 : i32
    return %c0_i32 : i32
  }
  func.func @transform_3(%arg0: i32) -> i32 {
    %c0_i32 = arith.constant 0 : i32
    %c0_i32_0 = arith.constant 0 : i32
    return %c0_i32 : i32
  }
  func.func @transform_4(%arg0: i32) -> i32 {
    %c0_i32 = arith.constant 0 : i32
    %c0_i32_0 = arith.constant 0 : i32
    return %c0_i32 : i32
  }
  func.func @transform_5(%arg0: i32) -> i32 {
    %c0_i32 = arith.constant 0 : i32
    %c0_i32_0 = arith.constant 0 : i32
    return %c0_i32 : i32
  }
  func.func @transform_6(%arg0: i32) -> (i32, i32) {
    %c0_i32 = arith.constant 0 : i32
    %c0_i32_0 = arith.constant 0 : i32
    return %arg0, %c0_i32 : i32, i32
  }
}

</mosaic_0001>

<llo_original>
// kernel: tpu_custom_call.1
$region0: #{tpu_custom_call.1}
  #allocation0 [shape = 'u32[]', space=smem, size = 0x4, offset = 0x4, fixed_abs, tag = 'smem constant byte address 0x4 - core index']
  #allocation1 [shape = 'u32[144,128]{1,0:T(1,128)}', space=vmem, size = 0x12000, scoped, tag = 'internal scratch']
  %s0 = inlined_call_operand.hbm [shape: f32[3,3,128], index: 0, kind: input, shape index: {}]
  %s1 = inlined_call_operand.vmem [shape: f32[72], index: 1, kind: input, shape index: {}]
  %s2 = inlined_call_operand.vmem [shape: f32[24], index: 2, kind: input, shape index: {}]
  %s3 = inlined_call_operand.vmem [shape: f32[8], index: 3, kind: input, shape index: {}]
  %s4 = inlined_call_operand.vmem [shape: f32[36], index: 4, kind: input, shape index: {}]
  %s5 = inlined_call_operand.vmem [shape: f32[12], index: 5, kind: input, shape index: {}]
  %s6 = inlined_call_operand.hbm [shape: f32[3,128], index: 6, kind: output, shape index: {}]
  %s7 = sld [smem:[#allocation0]]
  $region58: #{tpu_custom_call.1} parent=0
    _
  %s9 = ssub.s32 1, %s7
  %s10 = scalar_select 0, %s9, %s7
  $region1: #{tpu_custom_call.1} parent=0
    #allocation2 [shape = 'u8[6144]{0}', space=vmem, size = 0x1800, scoped, tag = 'input window, operand 0, single buffered']
    #allocation3 [shape = 's32[1]{0}', space=sflag, size = 0x4, scoped, tag = 'scoped memory for tpu_custom_call.1']
    #allocation4 [shape = 's32[1]{0}', space=sflag, size = 0x4, scoped, tag = 'scoped memory for tpu_custom_call.1']
    #allocation5 [shape = 's32[1]{0}', space=sflag, size = 0x4, scoped, tag = 'scoped memory for tpu_custom_call.1']
    #allocation6 [shape = 'u8[512]{0}', space=smem, size = 0x200, scoped, tag = 'input window, operand 1, single buffered']
    #allocation7 [shape = 'u8[512]{0}', space=smem, size = 0x200, scoped, tag = 'input window, operand 2, single buffered']
    #allocation8 [shape = 's32[1]{0}', space=sflag, size = 0x4, scoped, tag = 'scoped memory for tpu_custom_call.1']
    #allocation9 [shape = 'u8[512]{0}', space=smem, size = 0x200, scoped, tag = 'input window, operand 3, single buffered']
    #allocation10 [shape = 'u8[512]{0}', space=smem, size = 0x200, scoped, tag = 'input window, operand 4, single buffered']
    #allocation11 [shape = 's32[1]{0}', space=sflag, size = 0x4, scoped, tag = 'scoped memory for tpu_custom_call.1']
    #allocation12 [shape = 'u8[512]{0}', space=smem, size = 0x200, scoped, tag = 'input window, operand 5, single buffered']
    #allocation13 [shape = 'u8[2048]{0}', space=vmem, size = 0x800, scoped, tag = 'output window, operand 0, single buffered']
    %11 = vsyncpa [#allocation3], 0
    %12 = vsyncpa [#allocation5], 0
    %13 = vsyncpa [#allocation8], 0
    %14 = vsyncpa [#allocation11], 0
    %15 = vsyncpa [#allocation4], 0
    // Predicated region
    $region2: #{tpu_custom_call.1} parent=1 // pred_check
      _
    $region3: #{tpu_custom_call.1} parent=1 // pred_check_branch
      %17 = sbr.rel (0) target = $region5
    $region4: #{tpu_custom_call.1} parent=1 // pred_region
      %s19 = ssub.s32 192, 192
      %20 = vsyncadd [#allocation3], %s19
      %s21 = sshll.u32 [#allocation2], 4
      %s22 = int_to_ptr.vmem [resolvable:$true] %s21
      %27 = dma.hbm_to_vmem [thread:$0]  %s0, 192, %s22, [#allocation3], 64, 64, 4
    $region5: #{tpu_custom_call.1} parent=1 // pred_fallthru
      _
    // Predicated region
    $region6: #{tpu_custom_call.1} parent=1 // pred_check
      _
    $region7: #{tpu_custom_call.1} parent=1 // pred_check_branch
      %29 = sbr.rel (0) target = $region9
    $region8: #{tpu_custom_call.1} parent=1 // pred_region
      %s31 = ssub.s32 16, 16
      %32 = vsyncadd [#allocation5], %s31
      %s34 = sshll.u32 %s1, 4
      %s35 = int_to_ptr.vmem [resolvable:$true] %s34
      %37 = dma.vmem_to_smem %s35, 16, [#allocation6], [#allocation5]
    $region9: #{tpu_custom_call.1} parent=1 // pred_fallthru
      _
    // Predicated region
    $region10: #{tpu_custom_call.1} parent=1 // pred_check
      _
    $region11: #{tpu_custom_call.1} parent=1 // pred_check_branch
      %39 = sbr.rel (0) target = $region13
    $region12: #{tpu_custom_call.1} parent=1 // pred_region
      %s41 = ssub.s32 16, 16
      %42 = vsyncadd [#allocation8], %s41
      %s44 = sshll.u32 %s2, 4
      %s45 = int_to_ptr.vmem [resolvable:$true] %s44
      %47 = dma.vmem_to_smem %s45, 16, [#allocation7], [#allocation8]
    $region13: #{tpu_custom_call.1} parent=1 // pred_fallthru
      _
    // Predicated region
    $region14: #{tpu_custom_call.1} parent=1 // pred_check
      _
    $region15: #{tpu_custom_call.1} parent=1 // pred_check_branch
      %49 = sbr.rel (0) target = $region17
    $region16: #{tpu_custom_call.1} parent=1 // pred_region
      %s51 = ssub.s32 16, 16
      %52 = vsyncadd [#allocation8], %s51
      %s54 = sshll.u32 %s3, 4
      %s55 = int_to_ptr.vmem [resolvable:$true] %s54
      %57 = dma.vmem_to_smem %s55, 16, [#allocation9], [#allocation8]
    $region17: #{tpu_custom_call.1} parent=1 // pred_fallthru
      _
    // Predicated region
    $region18: #{tpu_custom_call.1} parent=1 // pred_check
      _
    $region19: #{tpu_custom_call.1} parent=1 // pred_check_branch
      %59 = sbr.rel (0) target = $region21
    $region20: #{tpu_custom_call.1} parent=1 // pred_region
      %s61 = ssub.s32 16, 16
      %62 = vsyncadd [#allocation11], %s61
      %s64 = sshll.u32 %s4, 4
      %s65 = int_to_ptr.vmem [resolvable:$true] %s64
      %67 = dma.vmem_to_smem %s65, 16, [#allocation10], [#allocation11]
    $region21: #{tpu_custom_call.1} parent=1 // pred_fallthru
      _
    // Predicated region
    $region22: #{tpu_custom_call.1} parent=1 // pred_check
      _
    $region23: #{tpu_custom_call.1} parent=1 // pred_check_branch
      %69 = sbr.rel (0) target = $region25
    $region24: #{tpu_custom_call.1} parent=1 // pred_region
      %s71 = ssub.s32 16, 16
      %72 = vsyncadd [#allocation11], %s71
      %s74 = sshll.u32 %s5, 4
      %s75 = int_to_ptr.vmem [resolvable:$true] %s74
      %77 = dma.vmem_to_smem %s75, 16, [#allocation12], [#allocation11]
    $region25: #{tpu_custom_call.1} parent=1 // pred_fallthru
      _
    // Predicated region
    $region26: #{tpu_custom_call.1} parent=1 // pred_check
      _
    $region27: #{tpu_custom_call.1} parent=1 // pred_check_branch
      %79 = sbr.rel (0) target = $region29
    $region28: #{tpu_custom_call.1} parent=1 // pred_region
      %80 = dma.done [#allocation3], 192
    $region29: #{tpu_custom_call.1} parent=1 // pred_fallthru
      _
    // Predicated region
    $region30: #{tpu_custom_call.1} parent=1 // pred_check
      _
    $region31: #{tpu_custom_call.1} parent=1 // pred_check_branch
      %82 = sbr.rel (0) target = $region33
    $region32: #{tpu_custom_call.1} parent=1 // pred_region
      %83 = dma.done [#allocation5], 16
    $region33: #{tpu_custom_call.1} parent=1 // pred_fallthru
      _
    // Predicated region
    $region34: #{tpu_custom_call.1} parent=1 // pred_check
      _
    $region35: #{tpu_custom_call.1} parent=1 // pred_check_branch
      %85 = sbr.rel (0) target = $region37
    $region36: #{tpu_custom_call.1} parent=1 // pred_region
      %86 = dma.done [#allocation8], 16
    $region37: #{tpu_custom_call.1} parent=1 // pred_fallthru
      _
    // Predicated region
    $region38: #{tpu_custom_call.1} parent=1 // pred_check
      _
    $region39: #{tpu_custom_call.1} parent=1 // pred_check_branch
      %88 = sbr.rel (0) target = $region41
    $region40: #{tpu_custom_call.1} parent=1 // pred_region
      %89 = dma.done [#allocation8], 16
    $region41: #{tpu_custom_call.1} parent=1 // pred_fallthru
      _
    // Predicated region
    $region42: #{tpu_custom_call.1} parent=1 // pred_check
      _
    $region43: #{tpu_custom_call.1} parent=1 // pred_check_branch
      %91 = sbr.rel (0) target = $region45
    $region44: #{tpu_custom_call.1} parent=1 // pred_region
      %92 = dma.done [#allocation11], 16
    $region45: #{tpu_custom_call.1} parent=1 // pred_fallthru
      _
    // Predicated region
    $region46: #{tpu_custom_call.1} parent=1 // pred_check
      _
    $region47: #{tpu_custom_call.1} parent=1 // pred_check_branch
      %94 = sbr.rel (0) target = $region49
    $region48: #{tpu_custom_call.1} parent=1 // pred_region
      %95 = dma.done [#allocation11], 16
    $region49: #{tpu_custom_call.1} parent=1 // pred_fallthru
      _
    %96 = sfence
    %v97 = vld [vmem:[#allocation2] sm:$0x7]
    %s98 = scalar_lea.vmem [#allocation2], 4
    %v99 = vld [vmem:[%s98] sm:$0x7]
    %s100 = scalar_lea.vmem [#allocation2], 8
    %v101 = vld [vmem:[%s100] sm:$0x7]
    %s102 = sld [smem:[#allocation6]]
    %v103 = vstv %s102
    %v104 = vmul.f32 %v97, %v103
    %s105 = sld [smem:[#allocation6 + $0x1]]
    %v106 = vstv %s105
    %v107 = vmul.f32 %v99, %v106
    %v108 = vadd.f32 %v104, %v107
    %s109 = sld [smem:[#allocation6 + $0x2]]
    %v110 = vstv %s109
    %v111 = vmul.f32 %v101, %v110
    %v112 = vadd.f32 %v108, %v111
    %s113 = sld [smem:[#allocation7]]
    %v114 = vstv %s113
    %v115 = vadd.f32 %v112, %v114
    %v116 = vmul.f32 %v115, %v115
    %s117 = sld [smem:[#allocation6 + $0x3]]
    %v118 = vstv %s117
    %v119 = vmul.f32 %v97, %v118
    %s120 = sld [smem:[#allocation6 + $0x4]]
    %v121 = vstv %s120
    %v122 = vmul.f32 %v99, %v121
    %v123 = vadd.f32 %v119, %v122
    %s124 = sld [smem:[#allocation6 + $0x5]]
    %v125 = vstv %s124
    %v126 = vmul.f32 %v101, %v125
    %v127 = vadd.f32 %v123, %v126
    %s128 = sld [smem:[#allocation7 + $0x1]]
    %v129 = vstv %s128
    %v130 = vadd.f32 %v127, %v129
    %v131 = vmul.f32 %v130, %v130
    %v132 = vadd.f32 %v116, %v131
    %s133 = sld [smem:[#allocation6 + $0x6]]
    %v134 = vstv %s133
    %v135 = vmul.f32 %v97, %v134
    %s136 = sld [smem:[#allocation6 + $0x7]]
    %v137 = vstv %s136
    %v138 = vmul.f32 %v99, %v137
    %v139 = vadd.f32 %v135, %v138
    %s140 = sld [smem:[#allocation6 + $0x8]]
    %v141 = vstv %s140
    %v142 = vmul.f32 %v101, %v141
    %v143 = vadd.f32 %v139, %v142
    %s144 = sld [smem:[#allocation7 + $0x2]]
    %v145 = vstv %s144
    %v146 = vadd.f32 %v143, %v145
    %v147 = vmul.f32 %v146, %v146
    %v148 = vadd.f32 %v132, %v147
    %v149 = vrsqrt.pop %v148
    %v150 = vmul.f32 %v148, %v149
    %vm151 = vcmp.eq.f32.partialorder %v148, inf
    %v152 = vsel %vm151, %v148, %v150
    %vm153 = vcmp.eq.f32.partialorder %v148, 0.0
    %v154 = vand.u32 %v148, 2147483648
    %v155 = vsel %vm153, %v154, %v152
    %v156 = vsub.f32 0.0, %v155
    %v157 = vmul.f32 %v156, 1.442695
    %v158 = vpow.pop %v157
    %s159 = sld [smem:[#allocation9]]
    %v160 = vstv %s159
    %v161 = vmul.f32 %v158, %v160
    %v162 = vadd.f32 %v161, 0.0
    %s163 = sld [smem:[#allocation6 + $0x9]]
    %v164 = vstv %s163
    %v165 = vmul.f32 %v97, %v164
    %s166 = sld [smem:[#allocation6 + $0xa]]
    %v167 = vstv %s166
    %v168 = vmul.f32 %v99, %v167
    %v169 = vadd.f32 %v165, %v168
    %s170 = sld [smem:[#allocation6 + $0xb]]
    %v171 = vstv %s170
    %v172 = vmul.f32 %v101, %v171
    %v173 = vadd.f32 %v169, %v172
    %s174 = sld [smem:[#allocation7 + $0x3]]
    %v175 = vstv %s174
    %v176 = vadd.f32 %v173, %v175
    %v177 = vmul.f32 %v176, %v176
    %s178 = sld [smem:[#allocation6 + $0xc]]
    %v179 = vstv %s178
    %v180 = vmul.f32 %v97, %v179
    %s181 = sld [smem:[#allocation6 + $0xd]]
    %v182 = vstv %s181
    %v183 = vmul.f32 %v99, %v182
    %v184 = vadd.f32 %v180, %v183
    %s185 = sld [smem:[#allocation6 + $0xe]]
    %v186 = vstv %s185
    %v187 = vmul.f32 %v101, %v186
    %v188 = vadd.f32 %v184, %v187
    %s189 = sld [smem:[#allocation7 + $0x4]]
    %v190 = vstv %s189
    %v191 = vadd.f32 %v188, %v190
    %v192 = vmul.f32 %v191, %v191
    %v193 = vadd.f32 %v177, %v192
    %s194 = sld [smem:[#allocation6 + $0xf]]
    %v195 = vstv %s194
    %v196 = vmul.f32 %v97, %v195
    %s197 = sld [smem:[#allocation6 + $0x10]]
    %v198 = vstv %s197
    %v199 = vmul.f32 %v99, %v198
    %v200 = vadd.f32 %v196, %v199
    %s201 = sld [smem:[#allocation6 + $0x11]]
    %v202 = vstv %s201
    %v203 = vmul.f32 %v101, %v202
    %v204 = vadd.f32 %v200, %v203
    %s205 = sld [smem:[#allocation7 + $0x5]]
    %v206 = vstv %s205
    %v207 = vadd.f32 %v204, %v206
    %v208 = vmul.f32 %v207, %v207
    %v209 = vadd.f32 %v193, %v208
    %v210 = vrsqrt.pop %v209
    %v211 = vmul.f32 %v209, %v210
    %vm212 = vcmp.eq.f32.partialorder %v209, inf
    %v213 = vsel %vm212, %v209, %v211
    %vm214 = vcmp.eq.f32.partialorder %v209, 0.0
    %v215 = vand.u32 %v209, 2147483648
    %v216 = vsel %vm214, %v215, %v213
    %v217 = vsub.f32 0.0, %v216
    %v218 = vmul.f32 %v217, 1.442695
    %v219 = vpow.pop %v218
    %s220 = sld [smem:[#allocation9 + $0x1]]
    %v221 = vstv %s220
    %v222 = vmul.f32 %v219, %v221
    %v223 = vadd.f32 %v162, %v222
    %s224 = sld [smem:[#allocation6 + $0x12]]
    %v225 = vstv %s224
    %v226 = vmul.f32 %v97, %v225
    %s227 = sld [smem:[#allocation6 + $0x13]]
    %v228 = vstv %s227
    %v229 = vmul.f32 %v99, %v228
    %v230 = vadd.f32 %v226, %v229
    %s231 = sld [smem:[#allocation6 + $0x14]]
    %v232 = vstv %s231
    %v233 = vmul.f32 %v101, %v232
    %v234 = vadd.f32 %v230, %v233
    %s235 = sld [smem:[#allocation7 + $0x6]]
    %v236 = vstv %s235
    %v237 = vadd.f32 %v234, %v236
    %v238 = vmul.f32 %v237, %v237
    %s239 = sld [smem:[#allocation6 + $0x15]]
    %v240 = vstv %s239
    %v241 = vmul.f32 %v97, %v240
    %s242 = sld [smem:[#allocation6 + $0x16]]
    %v243 = vstv %s242
    %v244 = vmul.f32 %v99, %v243
    %v245 = vadd.f32 %v241, %v244
    %s246 = sld [smem:[#allocation6 + $0x17]]
    %v247 = vstv %s246
    %v248 = vmul.f32 %v101, %v247
    %v249 = vadd.f32 %v245, %v248
    %s250 = sld [smem:[#allocation7 + $0x7]]
    %v251 = vstv %s250
    %v252 = vadd.f32 %v249, %v251
    %v253 = vmul.f32 %v252, %v252
    %v254 = vadd.f32 %v238, %v253
    %s255 = sld [smem:[#allocation6 + $0x18]]
    %v256 = vstv %s255
    %v257 = vmul.f32 %v97, %v256
    %s258 = sld [smem:[#allocation6 + $0x19]]
    %v259 = vstv %s258
    %v260 = vmul.f32 %v99, %v259
    %v261 = vadd.f32 %v257, %v260
    %s262 = sld [smem:[#allocation6 + $0x1a]]
    %v263 = vstv %s262
    %v264 = vmul.f32 %v101, %v263
    %v265 = vadd.f32 %v261, %v264
    %s266 = sld [smem:[#allocation7 + $0x8]]
    %v267 = vstv %s266
    %v268 = vadd.f32 %v265, %v267
    %v269 = vmul.f32 %v268, %v268
    %v270 = vadd.f32 %v254, %v269
    %v271 = vrsqrt.pop %v270
    %v272 = vmul.f32 %v270, %v271
    %vm273 = vcmp.eq.f32.partialorder %v270, inf
    %v274 = vsel %vm273, %v270, %v272
    %vm275 = vcmp.eq.f32.partialorder %v270, 0.0
    %v276 = vand.u32 %v270, 2147483648
    %v277 = vsel %vm275, %v276, %v274
    %v278 = vsub.f32 0.0, %v277
    %v279 = vmul.f32 %v278, 1.442695
    %v280 = vpow.pop %v279
    %s281 = sld [smem:[#allocation9 + $0x2]]
    %v282 = vstv %s281
    %v283 = vmul.f32 %v280, %v282
    %v284 = vadd.f32 %v223, %v283
    %s285 = sld [smem:[#allocation6 + $0x1b]]
    %v286 = vstv %s285
    %v287 = vmul.f32 %v97, %v286
    %s288 = sld [smem:[#allocation6 + $0x1c]]
    %v289 = vstv %s288
    %v290 = vmul.f32 %v99, %v289
    %v291 = vadd.f32 %v287, %v290
    %s292 = sld [smem:[#allocation6 + $0x1d]]
    %v293 = vstv %s292
    %v294 = vmul.f32 %v101, %v293
    %v295 = vadd.f32 %v291, %v294
    %s296 = sld [smem:[#allocation7 + $0x9]]
    %v297 = vstv %s296
    %v298 = vadd.f32 %v295, %v297
    %v299 = vmul.f32 %v298, %v298
    %s300 = sld [smem:[#allocation6 + $0x1e]]
    %v301 = vstv %s300
    %v302 = vmul.f32 %v97, %v301
    %s303 = sld [smem:[#allocation6 + $0x1f]]
    %v304 = vstv %s303
    %v305 = vmul.f32 %v99, %v304
    %v306 = vadd.f32 %v302, %v305
    %s307 = sld [smem:[#allocation6 + $0x20]]
    %v308 = vstv %s307
    %v309 = vmul.f32 %v101, %v308
    %v310 = vadd.f32 %v306, %v309
    %s311 = sld [smem:[#allocation7 + $0xa]]
    %v312 = vstv %s311
    %v313 = vadd.f32 %v310, %v312
    %v314 = vmul.f32 %v313, %v313
    %v315 = vadd.f32 %v299, %v314
    %s316 = sld [smem:[#allocation6 + $0x21]]
    %v317 = vstv %s316
    %v318 = vmul.f32 %v97, %v317
    %s319 = sld [smem:[#allocation6 + $0x22]]
    %v320 = vstv %s319
    %v321 = vmul.f32 %v99, %v320
    %v322 = vadd.f32 %v318, %v321
    %s323 = sld [smem:[#allocation6 + $0x23]]
    %v324 = vstv %s323
    %v325 = vmul.f32 %v101, %v324
    %v326 = vadd.f32 %v322, %v325
    %s327 = sld [smem:[#allocation7 + $0xb]]
    %v328 = vstv %s327
    %v329 = vadd.f32 %v326, %v328
    %v330 = vmul.f32 %v329, %v329
    %v331 = vadd.f32 %v315, %v330
    %v332 = vrsqrt.pop %v331
    %v333 = vmul.f32 %v331, %v332
    %vm334 = vcmp.eq.f32.partialorder %v331, inf
    %v335 = vsel %vm334, %v331, %v333
    %vm336 = vcmp.eq.f32.partialorder %v331, 0.0
    %v337 = vand.u32 %v331, 2147483648
    %v338 = vsel %vm336, %v337, %v335
    %v339 = vsub.f32 0.0, %v338
    %v340 = vmul.f32 %v339, 1.442695
    %v341 = vpow.pop %v340
    %s342 = sld [smem:[#allocation9 + $0x3]]
    %v343 = vstv %s342
    %v344 = vmul.f32 %v341, %v343
    %v345 = vadd.f32 %v284, %v344
    %s346 = sld [smem:[#allocation6 + $0x24]]
    %v347 = vstv %s346
    %v348 = vmul.f32 %v97, %v347
    %s349 = sld [smem:[#allocation6 + $0x25]]
    %v350 = vstv %s349
    %v351 = vmul.f32 %v99, %v350
    %v352 = vadd.f32 %v348, %v351
    %s353 = sld [smem:[#allocation6 + $0x26]]
    %v354 = vstv %s353
    %v355 = vmul.f32 %v101, %v354
    %v356 = vadd.f32 %v352, %v355
    %s357 = sld [smem:[#allocation7 + $0xc]]
    %v358 = vstv %s357
    %v359 = vadd.f32 %v356, %v358
    %v360 = vmul.f32 %v359, %v359
    %s361 = sld [smem:[#allocation6 + $0x27]]
    %v362 = vstv %s361
    %v363 = vmul.f32 %v97, %v362
    %s364 = sld [smem:[#allocation6 + $0x28]]
    %v365 = vstv %s364
    %v366 = vmul.f32 %v99, %v365
    %v367 = vadd.f32 %v363, %v366
    %s368 = sld [smem:[#allocation6 + $0x29]]
    %v369 = vstv %s368
    %v370 = vmul.f32 %v101, %v369
    %v371 = vadd.f32 %v367, %v370
    %s372 = sld [smem:[#allocation7 + $0xd]]
    %v373 = vstv %s372
    %v374 = vadd.f32 %v371, %v373
    %v375 = vmul.f32 %v374, %v374
    %v376 = vadd.f32 %v360, %v375
    %s377 = sld [smem:[#allocation6 + $0x2a]]
    %v378 = vstv %s377
    %v379 = vmul.f32 %v97, %v378
    %s380 = sld [smem:[#allocation6 + $0x2b]]
    %v381 = vstv %s380
    %v382 = vmul.f32 %v99, %v381
    %v383 = vadd.f32 %v379, %v382
    %s384 = sld [smem:[#allocation6 + $0x2c]]
    %v385 = vstv %s384
    %v386 = vmul.f32 %v101, %v385
    %v387 = vadd.f32 %v383, %v386
    %s388 = sld [smem:[#allocation7 + $0xe]]
    %v389 = vstv %s388
    %v390 = vadd.f32 %v387, %v389
    %v391 = vmul.f32 %v390, %v390
    %v392 = vadd.f32 %v376, %v391
    %v393 = vrsqrt.pop %v392
    %v394 = vmul.f32 %v392, %v393
    %vm395 = vcmp.eq.f32.partialorder %v392, inf
    %v396 = vsel %vm395, %v392, %v394
    %vm397 = vcmp.eq.f32.partialorder %v392, 0.0
    %v398 = vand.u32 %v392, 2147483648
    %v399 = vsel %vm397, %v398, %v396
    %v400 = vsub.f32 0.0, %v399
    %v401 = vmul.f32 %v400, 1.442695
    %v402 = vpow.pop %v401
    %s403 = sld [smem:[#allocation9 + $0x4]]
    %v404 = vstv %s403
    %v405 = vmul.f32 %v402, %v404
    %v406 = vadd.f32 %v345, %v405
    %s407 = sld [smem:[#allocation6 + $0x2d]]
    %v408 = vstv %s407
    %v409 = vmul.f32 %v97, %v408
    %s410 = sld [smem:[#allocation6 + $0x2e]]
    %v411 = vstv %s410
    %v412 = vmul.f32 %v99, %v411
    %v413 = vadd.f32 %v409, %v412
    %s414 = sld [smem:[#allocation6 + $0x2f]]
    %v415 = vstv %s414
    %v416 = vmul.f32 %v101, %v415
    %v417 = vadd.f32 %v413, %v416
    %s418 = sld [smem:[#allocation7 + $0xf]]
    %v419 = vstv %s418
    %v420 = vadd.f32 %v417, %v419
    %v421 = vmul.f32 %v420, %v420
    %s422 = sld [smem:[#allocation6 + $0x30]]
    %v423 = vstv %s422
    %v424 = vmul.f32 %v97, %v423
    %s425 = sld [smem:[#allocation6 + $0x31]]
    %v426 = vstv %s425
    %v427 = vmul.f32 %v99, %v426
    %v428 = vadd.f32 %v424, %v427
    %s429 = sld [smem:[#allocation6 + $0x32]]
    %v430 = vstv %s429
    %v431 = vmul.f32 %v101, %v430
    %v432 = vadd.f32 %v428, %v431
    %s433 = sld [smem:[#allocation7 + $0x10]]
    %v434 = vstv %s433
    %v435 = vadd.f32 %v432, %v434
    %v436 = vmul.f32 %v435, %v435
    %v437 = vadd.f32 %v421, %v436
    %s438 = sld [smem:[#allocation6 + $0x33]]
    %v439 = vstv %s438
    %v440 = vmul.f32 %v97, %v439
    %s441 = sld [smem:[#allocation6 + $0x34]]
    %v442 = vstv %s441
    %v443 = vmul.f32 %v99, %v442
    %v444 = vadd.f32 %v440, %v443
    %s445 = sld [smem:[#allocation6 + $0x35]]
    %v446 = vstv %s445
    %v447 = vmul.f32 %v101, %v446
    %v448 = vadd.f32 %v444, %v447
    %s449 = sld [smem:[#allocation7 + $0x11]]
    %v450 = vstv %s449
    %v451 = vadd.f32 %v448, %v450
    %v452 = vmul.f32 %v451, %v451
    %v453 = vadd.f32 %v437, %v452
    %v454 = vrsqrt.pop %v453
    %v455 = vmul.f32 %v453, %v454
    %vm456 = vcmp.eq.f32.partialorder %v453, inf
    %v457 = vsel %vm456, %v453, %v455
    %vm458 = vcmp.eq.f32.partialorder %v453, 0.0
    %v459 = vand.u32 %v453, 2147483648
    %v460 = vsel %vm458, %v459, %v457
    %v461 = vsub.f32 0.0, %v460
    %v462 = vmul.f32 %v461, 1.442695
    %v463 = vpow.pop %v462
    %s464 = sld [smem:[#allocation9 + $0x5]]
    %v465 = vstv %s464
    %v466 = vmul.f32 %v463, %v465
    %v467 = vadd.f32 %v406, %v466
    %s468 = sld [smem:[#allocation6 + $0x36]]
    %v469 = vstv %s468
    %v470 = vmul.f32 %v97, %v469
    %s471 = sld [smem:[#allocation6 + $0x37]]
    %v472 = vstv %s471
    %v473 = vmul.f32 %v99, %v472
    %v474 = vadd.f32 %v470, %v473
    %s475 = sld [smem:[#allocation6 + $0x38]]
    %v476 = vstv %s475
    %v477 = vmul.f32 %v101, %v476
    %v478 = vadd.f32 %v474, %v477
    %s479 = sld [smem:[#allocation7 + $0x12]]
    %v480 = vstv %s479
    %v481 = vadd.f32 %v478, %v480
    %v482 = vmul.f32 %v481, %v481
    %s483 = sld [smem:[#allocation6 + $0x39]]
    %v484 = vstv %s483
    %v485 = vmul.f32 %v97, %v484
    %s486 = sld [smem:[#allocation6 + $0x3a]]
    %v487 = vstv %s486
    %v488 = vmul.f32 %v99, %v487
    %v489 = vadd.f32 %v485, %v488
    %s490 = sld [smem:[#allocation6 + $0x3b]]
    %v491 = vstv %s490
    %v492 = vmul.f32 %v101, %v491
    %v493 = vadd.f32 %v489, %v492
    %s494 = sld [smem:[#allocation7 + $0x13]]
    %v495 = vstv %s494
    %v496 = vadd.f32 %v493, %v495
    %v497 = vmul.f32 %v496, %v496
    %v498 = vadd.f32 %v482, %v497
    %s499 = sld [smem:[#allocation6 + $0x3c]]
    %v500 = vstv %s499
    %v501 = vmul.f32 %v97, %v500
    %s502 = sld [smem:[#allocation6 + $0x3d]]
    %v503 = vstv %s502
    %v504 = vmul.f32 %v99, %v503
    %v505 = vadd.f32 %v501, %v504
    %s506 = sld [smem:[#allocation6 + $0x3e]]
    %v507 = vstv %s506
    %v508 = vmul.f32 %v101, %v507
    %v509 = vadd.f32 %v505, %v508
    %s510 = sld [smem:[#allocation7 + $0x14]]
    %v511 = vstv %s510
    %v512 = vadd.f32 %v509, %v511
    %v513 = vmul.f32 %v512, %v512
    %v514 = vadd.f32 %v498, %v513
    %v515 = vrsqrt.pop %v514
    %v516 = vmul.f32 %v514, %v515
    %vm517 = vcmp.eq.f32.partialorder %v514, inf
    %v518 = vsel %vm517, %v514, %v516
    %vm519 = vcmp.eq.f32.partialorder %v514, 0.0
    %v520 = vand.u32 %v514, 2147483648
    %v521 = vsel %vm519, %v520, %v518
    %v522 = vsub.f32 0.0, %v521
    %v523 = vmul.f32 %v522, 1.442695
    %v524 = vpow.pop %v523
    %s525 = sld [smem:[#allocation9 + $0x6]]
    %v526 = vstv %s525
    %v527 = vmul.f32 %v524, %v526
    %v528 = vadd.f32 %v467, %v527
    %s529 = sld [smem:[#allocation6 + $0x3f]]
    %v530 = vstv %s529
    %v531 = vmul.f32 %v97, %v530
    %s532 = sld [smem:[#allocation6 + $0x40]]
    %v533 = vstv %s532
    %v534 = vmul.f32 %v99, %v533
    %v535 = vadd.f32 %v531, %v534
    %s536 = sld [smem:[#allocation6 + $0x41]]
    %v537 = vstv %s536
    %v538 = vmul.f32 %v101, %v537
    %v539 = vadd.f32 %v535, %v538
    %s540 = sld [smem:[#allocation7 + $0x15]]
    %v541 = vstv %s540
    %v542 = vadd.f32 %v539, %v541
    %v543 = vmul.f32 %v542, %v542
    %s544 = sld [smem:[#allocation6 + $0x42]]
    %v545 = vstv %s544
    %v546 = vmul.f32 %v97, %v545
    %s547 = sld [smem:[#allocation6 + $0x43]]
    %v548 = vstv %s547
    %v549 = vmul.f32 %v99, %v548
    %v550 = vadd.f32 %v546, %v549
    %s551 = sld [smem:[#allocation6 + $0x44]]
    %v552 = vstv %s551
    %v553 = vmul.f32 %v101, %v552
    %v554 = vadd.f32 %v550, %v553
    %s555 = sld [smem:[#allocation7 + $0x16]]
    %v556 = vstv %s555
    %v557 = vadd.f32 %v554, %v556
    %v558 = vmul.f32 %v557, %v557
    %v559 = vadd.f32 %v543, %v558
    %s560 = sld [smem:[#allocation6 + $0x45]]
    %v561 = vstv %s560
    %v562 = vmul.f32 %v97, %v561
    %s563 = sld [smem:[#allocation6 + $0x46]]
    %v564 = vstv %s563
    %v565 = vmul.f32 %v99, %v564
    %v566 = vadd.f32 %v562, %v565
    %s567 = sld [smem:[#allocation6 + $0x47]]
    %v568 = vstv %s567
    %v569 = vmul.f32 %v101, %v568
    %v570 = vadd.f32 %v566, %v569
    %s571 = sld [smem:[#allocation7 + $0x17]]
    %v572 = vstv %s571
    %v573 = vadd.f32 %v570, %v572
    %v574 = vmul.f32 %v573, %v573
    %v575 = vadd.f32 %v559, %v574
    %v576 = vrsqrt.pop %v575
    %v577 = vmul.f32 %v575, %v576
    %vm578 = vcmp.eq.f32.partialorder %v575, inf
    %v579 = vsel %vm578, %v575, %v577
    %vm580 = vcmp.eq.f32.partialorder %v575, 0.0
    %v581 = vand.u32 %v575, 2147483648
    %v582 = vsel %vm580, %v581, %v579
    %v583 = vsub.f32 0.0, %v582
    %v584 = vmul.f32 %v583, 1.442695
    %v585 = vpow.pop %v584
    %s586 = sld [smem:[#allocation9 + $0x7]]
    %v587 = vstv %s586
    %v588 = vmul.f32 %v585, %v587
    %v589 = vadd.f32 %v528, %v588
    %s590 = sld [smem:[#allocation10]]
    %v591 = vstv %s590
    %v592 = vmul.f32 %v97, %v591
    %s593 = sld [smem:[#allocation10 + $0x1]]
    %v594 = vstv %s593
    %v595 = vmul.f32 %v99, %v594
    %v596 = vadd.f32 %v592, %v595
    %s597 = sld [smem:[#allocation10 + $0x2]]
    %v598 = vstv %s597
    %v599 = vmul.f32 %v101, %v598
    %v600 = vadd.f32 %v596, %v599
    %s601 = sld [smem:[#allocation12]]
    %v602 = vstv %s601
    %v603 = vadd.f32 %v600, %v602
    %v604 = vmul.f32 %v603, %v603
    %s605 = sld [smem:[#allocation10 + $0x3]]
    %v606 = vstv %s605
    %v607 = vmul.f32 %v97, %v606
    %s608 = sld [smem:[#allocation10 + $0x4]]
    %v609 = vstv %s608
    %v610 = vmul.f32 %v99, %v609
    %v611 = vadd.f32 %v607, %v610
    %s612 = sld [smem:[#allocation10 + $0x5]]
    %v613 = vstv %s612
    %v614 = vmul.f32 %v101, %v613
    %v615 = vadd.f32 %v611, %v614
    %s616 = sld [smem:[#allocation12 + $0x1]]
    %v617 = vstv %s616
    %v618 = vadd.f32 %v615, %v617
    %v619 = vmul.f32 %v618, %v618
    %v620 = vadd.f32 %v604, %v619
    %s621 = sld [smem:[#allocation10 + $0x6]]
    %v622 = vstv %s621
    %v623 = vmul.f32 %v97, %v622
    %s624 = sld [smem:[#allocation10 + $0x7]]
    %v625 = vstv %s624
    %v626 = vmul.f32 %v99, %v625
    %v627 = vadd.f32 %v623, %v626
    %s628 = sld [smem:[#allocation10 + $0x8]]
    %v629 = vstv %s628
    %v630 = vmul.f32 %v101, %v629
    %v631 = vadd.f32 %v627, %v630
    %s632 = sld [smem:[#allocation12 + $0x2]]
    %v633 = vstv %s632
    %v634 = vadd.f32 %v631, %v633
    %v635 = vmul.f32 %v634, %v634
    %v636 = vadd.f32 %v620, %v635
    %v637 = vrsqrt.pop %v636
    %v638 = vmul.f32 %v636, %v637
    %vm639 = vcmp.eq.f32.partialorder %v636, inf
    %v640 = vsel %vm639, %v636, %v638
    %vm641 = vcmp.eq.f32.partialorder %v636, 0.0
    %v642 = vand.u32 %v636, 2147483648
    %v643 = vsel %vm641, %v642, %v640
    %v644 = vadd.f32 %v589, %v643
    %s645 = sld [smem:[#allocation10 + $0x9]]
    %v646 = vstv %s645
    %v647 = vmul.f32 %v97, %v646
    %s648 = sld [smem:[#allocation10 + $0xa]]
    %v649 = vstv %s648
    %v650 = vmul.f32 %v99, %v649
    %v651 = vadd.f32 %v647, %v650
    %s652 = sld [smem:[#allocation10 + $0xb]]
    %v653 = vstv %s652
    %v654 = vmul.f32 %v101, %v653
    %v655 = vadd.f32 %v651, %v654
    %s656 = sld [smem:[#allocation12 + $0x3]]
    %v657 = vstv %s656
    %v658 = vadd.f32 %v655, %v657
    %v659 = vmul.f32 %v658, %v658
    %s660 = sld [smem:[#allocation10 + $0xc]]
    %v661 = vstv %s660
    %v662 = vmul.f32 %v97, %v661
    %s663 = sld [smem:[#allocation10 + $0xd]]
    %v664 = vstv %s663
    %v665 = vmul.f32 %v99, %v664
    %v666 = vadd.f32 %v662, %v665
    %s667 = sld [smem:[#allocation10 + $0xe]]
    %v668 = vstv %s667
    %v669 = vmul.f32 %v101, %v668
    %v670 = vadd.f32 %v666, %v669
    %s671 = sld [smem:[#allocation12 + $0x4]]
    %v672 = vstv %s671
    %v673 = vadd.f32 %v670, %v672
    %v674 = vmul.f32 %v673, %v673
    %v675 = vadd.f32 %v659, %v674
    %s676 = sld [smem:[#allocation10 + $0xf]]
    %v677 = vstv %s676
    %v678 = vmul.f32 %v97, %v677
    %s679 = sld [smem:[#allocation10 + $0x10]]
    %v680 = vstv %s679
    %v681 = vmul.f32 %v99, %v680
    %v682 = vadd.f32 %v678, %v681
    %s683 = sld [smem:[#allocation10 + $0x11]]
    %v684 = vstv %s683
    %v685 = vmul.f32 %v101, %v684
    %v686 = vadd.f32 %v682, %v685
    %s687 = sld [smem:[#allocation12 + $0x5]]
    %v688 = vstv %s687
    %v689 = vadd.f32 %v686, %v688
    %v690 = vmul.f32 %v689, %v689
    %v691 = vadd.f32 %v675, %v690
    %v692 = vrsqrt.pop %v691
    %v693 = vmul.f32 %v691, %v692
    %vm694 = vcmp.eq.f32.partialorder %v691, inf
    %v695 = vsel %vm694, %v691, %v693
    %vm696 = vcmp.eq.f32.partialorder %v691, 0.0
    %v697 = vand.u32 %v691, 2147483648
    %v698 = vsel %vm696, %v697, %v695
    %v699 = vadd.f32 %v644, %v698
    %s700 = sld [smem:[#allocation10 + $0x12]]
    %v701 = vstv %s700
    %v702 = vmul.f32 %v97, %v701
    %s703 = sld [smem:[#allocation10 + $0x13]]
    %v704 = vstv %s703
    %v705 = vmul.f32 %v99, %v704
    %v706 = vadd.f32 %v702, %v705
    %s707 = sld [smem:[#allocation10 + $0x14]]
    %v708 = vstv %s707
    %v709 = vmul.f32 %v101, %v708
    %v710 = vadd.f32 %v706, %v709
    %s711 = sld [smem:[#allocation12 + $0x6]]
    %v712 = vstv %s711
    %v713 = vadd.f32 %v710, %v712
    %v714 = vmul.f32 %v713, %v713
    %s715 = sld [smem:[#allocation10 + $0x15]]
    %v716 = vstv %s715
    %v717 = vmul.f32 %v97, %v716
    %s718 = sld [smem:[#allocation10 + $0x16]]
    %v719 = vstv %s718
    %v720 = vmul.f32 %v99, %v719
    %v721 = vadd.f32 %v717, %v720
    %s722 = sld [smem:[#allocation10 + $0x17]]
    %v723 = vstv %s722
    %v724 = vmul.f32 %v101, %v723
    %v725 = vadd.f32 %v721, %v724
    %s726 = sld [smem:[#allocation12 + $0x7]]
    %v727 = vstv %s726
    %v728 = vadd.f32 %v725, %v727
    %v729 = vmul.f32 %v728, %v728
    %v730 = vadd.f32 %v714, %v729
    %s731 = sld [smem:[#allocation10 + $0x18]]
    %v732 = vstv %s731
    %v733 = vmul.f32 %v97, %v732
    %s734 = sld [smem:[#allocation10 + $0x19]]
    %v735 = vstv %s734
    %v736 = vmul.f32 %v99, %v735
    %v737 = vadd.f32 %v733, %v736
    %s738 = sld [smem:[#allocation10 + $0x1a]]
    %v739 = vstv %s738
    %v740 = vmul.f32 %v101, %v739
    %v741 = vadd.f32 %v737, %v740
    %s742 = sld [smem:[#allocation12 + $0x8]]
    %v743 = vstv %s742
    %v744 = vadd.f32 %v741, %v743
    %v745 = vmul.f32 %v744, %v744
    %v746 = vadd.f32 %v730, %v745
    %v747 = vrsqrt.pop %v746
    %v748 = vmul.f32 %v746, %v747
    %vm749 = vcmp.eq.f32.partialorder %v746, inf
    %v750 = vsel %vm749, %v746, %v748
    %vm751 = vcmp.eq.f32.partialorder %v746, 0.0
    %v752 = vand.u32 %v746, 2147483648
    %v753 = vsel %vm751, %v752, %v750
    %v754 = vadd.f32 %v699, %v753
    %s755 = sld [smem:[#allocation10 + $0x1b]]
    %v756 = vstv %s755
    %v757 = vmul.f32 %v97, %v756
    %s758 = sld [smem:[#allocation10 + $0x1c]]
    %v759 = vstv %s758
    %v760 = vmul.f32 %v99, %v759
    %v761 = vadd.f32 %v757, %v760
    %s762 = sld [smem:[#allocation10 + $0x1d]]
    %v763 = vstv %s762
    %v764 = vmul.f32 %v101, %v763
    %v765 = vadd.f32 %v761, %v764
    %s766 = sld [smem:[#allocation12 + $0x9]]
    %v767 = vstv %s766
    %v768 = vadd.f32 %v765, %v767
    %v769 = vmul.f32 %v768, %v768
    %s770 = sld [smem:[#allocation10 + $0x1e]]
    %v771 = vstv %s770
    %v772 = vmul.f32 %v97, %v771
    %s773 = sld [smem:[#allocation10 + $0x1f]]
    %v774 = vstv %s773
    %v775 = vmul.f32 %v99, %v774
    %v776 = vadd.f32 %v772, %v775
    %s777 = sld [smem:[#allocation10 + $0x20]]
    %v778 = vstv %s777
    %v779 = vmul.f32 %v101, %v778
    %v780 = vadd.f32 %v776, %v779
    %s781 = sld [smem:[#allocation12 + $0xa]]
    %v782 = vstv %s781
    %v783 = vadd.f32 %v780, %v782
    %v784 = vmul.f32 %v783, %v783
    %v785 = vadd.f32 %v769, %v784
    %s786 = sld [smem:[#allocation10 + $0x21]]
    %v787 = vstv %s786
    %v788 = vmul.f32 %v97, %v787
    %s789 = sld [smem:[#allocation10 + $0x22]]
    %v790 = vstv %s789
    %v791 = vmul.f32 %v99, %v790
    %v792 = vadd.f32 %v788, %v791
    %s793 = sld [smem:[#allocation10 + $0x23]]
    %v794 = vstv %s793
    %v795 = vmul.f32 %v101, %v794
    %v796 = vadd.f32 %v792, %v795
    %s797 = sld [smem:[#allocation12 + $0xb]]
    %v798 = vstv %s797
    %v799 = vadd.f32 %v796, %v798
    %v800 = vmul.f32 %v799, %v799
    %v801 = vadd.f32 %v785, %v800
    %v802 = vrsqrt.pop %v801
    %v803 = vmul.f32 %v801, %v802
    %vm804 = vcmp.eq.f32.partialorder %v801, inf
    %v805 = vsel %vm804, %v801, %v803
    %vm806 = vcmp.eq.f32.partialorder %v801, 0.0
    %v807 = vand.u32 %v801, 2147483648
    %v808 = vsel %vm806, %v807, %v805
    %v809 = vadd.f32 %v754, %v808
    %810 = vst [vmem:[#allocation13] sm:$0x7] %v809
    // Predicated region
    $region50: #{tpu_custom_call.1} parent=1 // pred_check
      _
    $region51: #{tpu_custom_call.1} parent=1 // pred_check_branch
      %812 = sbr.rel (0) target = $region53
    $region52: #{tpu_custom_call.1} parent=1 // pred_region
      %s814 = ssub.s32 64, 64
      %815 = vsyncadd [#allocation4], %s814
      %s817 = sshll.u32 [#allocation13], 4
      %s818 = int_to_ptr.vmem [resolvable:$true] %s817
      %820 = dma.vmem_to_hbm [thread:$0]  %s818, 64, %s6, [#allocation4]
    $region53: #{tpu_custom_call.1} parent=1 // pred_fallthru
      _
    // Predicated region
    $region54: #{tpu_custom_call.1} parent=1 // pred_check
      _
    $region55: #{tpu_custom_call.1} parent=1 // pred_check_branch
      %822 = sbr.rel (0) target = $region57
    $region56: #{tpu_custom_call.1} parent=1 // pred_region
      %823 = dma.done [#allocation4], 64
    $region57: #{tpu_custom_call.1} parent=1 // pred_fallthru
      _
    %824 = vsyncpa [#allocation3], 1
    %825 = vsyncpa [#allocation4], 1
    %826 = vsyncpa [#allocation5], 1
    %827 = vsyncpa [#allocation8], 1
    %828 = vsyncpa [#allocation11], 1

</llo_original>
